<compile_context>
chip_gen: v7x
topology: tpu7x:2x2x1
jax: 0.10.0
libtpu: 0.0.40
codegen_flags: <defaults>
</compile_context>

<pallas_src>
import math
from functools import partial

import jax
import jax.numpy as jnp
from jax.experimental import pallas as pl
from jax.experimental.pallas import tpu as pltpu


# ----------------------------- model constants ----------------------------- #

VOCAB = 100
TYPE_VOCAB = 2
MAX_POS = 16
HIDDEN = 32
N_HEADS = 2
HEAD_DIM = HIDDEN // N_HEADS
FFN = 64
N_LAYERS = 2
NUM_CLASSES = 2
LN_EPS = 1e-12
LOGITS_PAD = 128  # lane-dense output width for the classifier store


# ------------------------------ kernel helpers ------------------------------ #

def _bf16(x):
    return x.astype(jnp.bfloat16)


def _layernorm(x, g, b, eps):
    mu = jnp.mean(x, axis=-1, keepdims=True)
    xc = x - mu
    var = jnp.mean(xc * xc, axis=-1, keepdims=True)
    return xc * jax.lax.rsqrt(var + eps) * g + b


def _gelu(y):
    # tanh-approximate GELU (EUP-friendly).
    # TODO(synk): HF BERT default is erf-based gelu; tanh approx used for robust lowering.
    return 0.5 * y * (1.0 + jnp.tanh(0.7978845608028654 * (y + 0.044715 * y * y * y)))


# --------------------------- fused forward kernel --------------------------- #

def _fused_forward_kernel(emb_ref, bias_ref, embg_ref, embb_ref,
                          wqkv_ref, bqkv_ref, wo_ref, bo_ref,
                          ln1g_ref, ln1b_ref, w1_ref, b1_ref,
                          w2_ref, b2_ref, ln2g_ref, ln2b_ref,
                          clsw_ref, clsb_ref,
                          logits_ref, *,
                          n_layers, n_heads, head_dim, hidden, eps):
    # ---- embedding LayerNorm (folded into the kernel prologue) ----
    x = _layernorm(emb_ref[0].astype(jnp.float32), embg_ref[...], embb_ref[...], eps)  # [S, H]
    bias = bias_ref[0]                                                                 # [1, S]
    scale = 1.0 / math.sqrt(head_dim)

    for l in range(n_layers):                       # static unroll over layers (N_LAYERS=2)
        # ---- fused QKV projection: one [H, 3H] matmul (bf16 operands, f32 acc) ----
        qkv = jnp.dot(_bf16(x), _bf16(wqkv_ref[l]),
                      preferred_element_type=jnp.float32) + bqkv_ref[l]      # [S, 3H]

        wo = wo_ref[l]                                                       # [H, H]
        attn = bo_ref[l]                                                     # [1, H] (bias seed)
        for h in range(n_heads):
            lo = h * head_dim
            hi = lo + head_dim
            # static lane slices of the fused QKV output — no stack/concat relayouts
            q = qkv[:, lo:hi]                                                # [S, Dh]
            k = qkv[:, hidden + lo:hidden + hi]                              # [S, Dh]
            v = qkv[:, 2 * hidden + lo:2 * hidden + hi]                      # [S, Dh]

            # q @ k^T without an explicit transpose (contract on the Dh axis of both)
            s = jax.lax.dot_general(_bf16(q), _bf16(k), (((1,), (1,)), ((), ())),
                                    preferred_element_type=jnp.float32) * scale   # [S, S]
            s = s + bias                                                     # + additive mask
            s = s - jnp.max(s, axis=-1, keepdims=True)
            p = jnp.exp(s)
            p = p * pl.reciprocal(jnp.sum(p, axis=-1, keepdims=True), approx=True)
            ctx = jnp.dot(_bf16(p), _bf16(v), preferred_element_type=jnp.float32)  # [S, Dh]

            # concat of per-head contexts folded into the output projection:
            # attn += ctx_h @ Wo[h*Dh:(h+1)*Dh, :]
            attn = attn + jnp.dot(_bf16(ctx), _bf16(wo[lo:hi, :]),
                                  preferred_element_type=jnp.float32)        # [S, H]

        # ---- residual + LayerNorm ----
        y = _layernorm(x + attn, ln1g_ref[l], ln1b_ref[l], eps)

        # ---- fused FFN: dense + GELU + dense + residual + LayerNorm ----
        h1 = _gelu(jnp.dot(_bf16(y), _bf16(w1_ref[l]),
                           preferred_element_type=jnp.float32) + b1_ref[l])  # [S, F]
        ffn = jnp.dot(_bf16(h1), _bf16(w2_ref[l]),
                      preferred_element_type=jnp.float32) + b2_ref[l]        # [S, H]
        x = _layernorm(y + ffn, ln2g_ref[l], ln2b_ref[l], eps)

    # ---- hidden2tag on the [CLS] (row 0) token, padded to 128 lanes ----
    logits = jnp.dot(_bf16(x[0:1, :]), _bf16(clsw_ref[...]),
                     preferred_element_type=jnp.float32) + clsb_ref[...]     # [1, LOGITS_PAD]
    logits_ref[0] = logits.astype(logits_ref.dtype)                          # unmasked vst


# ------------------------- synthetic mini-BERT model ----------------------- #

def init_params(key):
    def nrm(k, shape, scale=0.02):
        return scale * jax.random.normal(k, shape, dtype=jnp.float32)

    keys = iter(jax.random.split(key, 8 + N_LAYERS * 8))
    p = {
        "word_emb": nrm(next(keys), (VOCAB, HIDDEN)),
        "pos_emb": nrm(next(keys), (MAX_POS, HIDDEN)),
        "type_emb": nrm(next(keys), (TYPE_VOCAB, HIDDEN)),
        "emb_ln_g": jnp.ones((HIDDEN,), jnp.float32),
        "emb_ln_b": jnp.zeros((HIDDEN,), jnp.float32),
        "cls_w": nrm(next(keys), (HIDDEN, NUM_CLASSES)),   # hidden2tag
        "cls_b": jnp.zeros((NUM_CLASSES,), jnp.float32),
        "layers": [],
    }
    for _ in range(N_LAYERS):
        layer = {
            # q|k|v projections pre-concatenated into a single [H, 3H] weight
            "wqkv": nrm(next(keys), (HIDDEN, 3 * HIDDEN)),
            "bqkv": jnp.zeros((3 * HIDDEN,), jnp.float32),
            "wo": nrm(next(keys), (HIDDEN, HIDDEN)), "bo": jnp.zeros((HIDDEN,), jnp.float32),
            "ln1_g": jnp.ones((HIDDEN,), jnp.float32), "ln1_b": jnp.zeros((HIDDEN,), jnp.float32),
            "w1": nrm(next(keys), (HIDDEN, FFN)), "b1": jnp.zeros((FFN,), jnp.float32),
            "w2": nrm(next(keys), (FFN, HIDDEN)), "b2": jnp.zeros((HIDDEN,), jnp.float32),
            "ln2_g": jnp.ones((HIDDEN,), jnp.float32), "ln2_b": jnp.zeros((HIDDEN,), jnp.float32),
        }
        p["layers"].append(layer)
    return p


def forward(params, input_ids, attention_mask, token_type_ids):
    B, S = input_ids.shape
    H, F, L, C = HIDDEN, FFN, len(params["layers"]), NUM_CLASSES

    # --- embeddings (gathers are plain-JAX glue outside the kernel) ---
    emb = (jnp.take(params["word_emb"], input_ids, axis=0)
           + params["pos_emb"][None, :S, :]
           + jnp.take(params["type_emb"], token_type_ids, axis=0))          # [B, S, H]

    # additive attention mask: [B, 1, S], 0 for keep, -10000 for masked
    bias = ((1.0 - attention_mask.astype(jnp.float32)) * -10000.0).reshape(B, 1, S)

    # --- stack per-layer weights along a leading [L, ...] axis (VMEM-resident) ---
    def stack(name, shape):
        return jnp.stack([params["layers"][l][name].reshape(shape) for l in range(L)], axis=0)

    wqkv = stack("wqkv", (H, 3 * H)); bqkv = stack("bqkv", (1, 3 * H))
    wo = stack("wo", (H, H)); bo = stack("bo", (1, H))
    ln1g = stack("ln1_g", (1, H)); ln1b = stack("ln1_b", (1, H))
    w1 = stack("w1", (H, F)); b1 = stack("b1", (1, F))
    w2 = stack("w2", (F, H)); b2 = stack("b2", (1, H))
    ln2g = stack("ln2_g", (1, H)); ln2b = stack("ln2_b", (1, H))

    # --- classifier padded to 128 output lanes for an unmasked store ---
    cls_w_pad = jnp.zeros((H, LOGITS_PAD), jnp.float32).at[:, :C].set(params["cls_w"])
    cls_b_pad = jnp.zeros((1, LOGITS_PAD), jnp.float32).at[:, :C].set(params["cls_b"].reshape(1, C))

    def full(shape):
        n = len(shape)
        return pl.BlockSpec(shape, lambda b, n=n: (0,) * n)

    in_specs = [
        pl.BlockSpec((1, S, H), lambda b: (b, 0, 0)),     # embeddings
        pl.BlockSpec((1, 1, S), lambda b: (b, 0, 0)),     # additive attention mask
        full((1, H)), full((1, H)),                       # embedding LN gamma/beta
        full((L, H, 3 * H)), full((L, 1, 3 * H)),         # wqkv, bqkv
        full((L, H, H)), full((L, 1, H)),                 # wo, bo
        full((L, 1, H)), full((L, 1, H)),                 # ln1 gamma/beta
        full((L, H, F)), full((L, 1, F)),                 # w1, b1
        full((L, F, H)), full((L, 1, H)),                 # w2, b2
        full((L, 1, H)), full((L, 1, H)),                 # ln2 gamma/beta
        full((H, LOGITS_PAD)), full((1, LOGITS_PAD)),     # classifier (padded)
    ]

    logits_pad = pl.pallas_call(
        partial(_fused_forward_kernel, n_layers=L, n_heads=N_HEADS,
                head_dim=HEAD_DIM, hidden=H, eps=LN_EPS),
        grid=(B,),
        in_specs=in_specs,
        out_specs=pl.BlockSpec((1, 1, LOGITS_PAD), lambda b: (b, 0, 0)),
        out_shape=jax.ShapeDtypeStruct((B, 1, LOGITS_PAD), jnp.float32),
        compiler_params=pltpu.CompilerParams(dimension_semantics=("parallel",)),
    )(emb, bias,
      params["emb_ln_g"].reshape(1, H), params["emb_ln_b"].reshape(1, H),
      wqkv, bqkv, wo, bo, ln1g, ln1b, w1, b1, w2, b2, ln2g, ln2b,
      cls_w_pad, cls_b_pad)

    return logits_pad[:, 0, :C]


# --------------------------------- main ------------------------------------ #

if __name__ == "__main__":
    key = jax.random.PRNGKey(0)
    k_par, k_ids, k_tt = jax.random.split(key, 3)

    B, S = 2, 8
    params = init_params(k_par)

    input_ids = jax.random.randint(k_ids, (B, S), 0, VOCAB, dtype=jnp.int32)
    attention_mask = jnp.array(
        [[1, 1, 1, 1, 1, 1, 1, 1],
         [1, 1, 1, 1, 1, 1, 0, 0]], dtype=jnp.int32)
    token_type_ids = jax.random.randint(k_tt, (B, S), 0, TYPE_VOCAB, dtype=jnp.int32)

    fwd = jax.jit(forward)
    logits = fwd(params, input_ids, attention_mask, token_type_ids)
    jax.block_until_ready(logits)

    assert logits.shape == (B, NUM_CLASSES)
    assert bool(jnp.all(jnp.isfinite(logits)))
    print("KERNEL_OK")
</pallas_src>

<mosaic_0001>
module attributes {stable_mosaic.version = 11 : i64} {
  func.func @_fused_forward_kernel(%arg0: i32, %arg1: memref<1x8x32xf32, #tpu.memory_space<vmem>>, %arg2: memref<1x1x8xf32, #tpu.memory_space<vmem>>, %arg3: memref<1x32xf32, #tpu.memory_space<vmem>>, %arg4: memref<1x32xf32, #tpu.memory_space<vmem>>, %arg5: memref<2x32x96xf32, #tpu.memory_space<vmem>>, %arg6: memref<2x1x96xf32, #tpu.memory_space<vmem>>, %arg7: memref<2x32x32xf32, #tpu.memory_space<vmem>>, %arg8: memref<2x1x32xf32, #tpu.memory_space<vmem>>, %arg9: memref<2x1x32xf32, #tpu.memory_space<vmem>>, %arg10: memref<2x1x32xf32, #tpu.memory_space<vmem>>, %arg11: memref<2x32x64xf32, #tpu.memory_space<vmem>>, %arg12: memref<2x1x64xf32, #tpu.memory_space<vmem>>, %arg13: memref<2x64x32xf32, #tpu.memory_space<vmem>>, %arg14: memref<2x1x32xf32, #tpu.memory_space<vmem>>, %arg15: memref<2x1x32xf32, #tpu.memory_space<vmem>>, %arg16: memref<2x1x32xf32, #tpu.memory_space<vmem>>, %arg17: memref<32x128xf32, #tpu.memory_space<vmem>>, %arg18: memref<1x128xf32, #tpu.memory_space<vmem>>, %arg19: memref<1x1x128xf32, #tpu.memory_space<vmem>>) attributes {dimension_semantics = [#tpu.dimension_semantics<parallel>], iteration_bounds = array<i64: 2>, scalar_prefetch = 0 : i64, scratch_operands = 0 : i64, tpu.core_type = #tpu.core_type<tc>, window_params = [{transform_indices = @transform_0, window_bounds = array<i64: 1, 8, 32>}, {transform_indices = @transform_1, window_bounds = array<i64: 1, 1, 8>}, {pipeline_mode = #tpu.pipeline_mode<synchronous>, transform_indices = @transform_2, window_bounds = array<i64: 1, 32>}, {pipeline_mode = #tpu.pipeline_mode<synchronous>, transform_indices = @transform_3, window_bounds = array<i64: 1, 32>}, {pipeline_mode = #tpu.pipeline_mode<synchronous>, transform_indices = @transform_4, window_bounds = array<i64: 2, 32, 96>}, {pipeline_mode = #tpu.pipeline_mode<synchronous>, transform_indices = @transform_5, window_bounds = array<i64: 2, 1, 96>}, {pipeline_mode = #tpu.pipeline_mode<synchronous>, transform_indices = @transform_6, window_bounds = array<i64: 2, 32, 32>}, {pipeline_mode = #tpu.pipeline_mode<synchronous>, transform_indices = @transform_7, window_bounds = array<i64: 2, 1, 32>}, {pipeline_mode = #tpu.pipeline_mode<synchronous>, transform_indices = @transform_8, window_bounds = array<i64: 2, 1, 32>}, {pipeline_mode = #tpu.pipeline_mode<synchronous>, transform_indices = @transform_9, window_bounds = array<i64: 2, 1, 32>}, {pipeline_mode = #tpu.pipeline_mode<synchronous>, transform_indices = @transform_10, window_bounds = array<i64: 2, 32, 64>}, {pipeline_mode = #tpu.pipeline_mode<synchronous>, transform_indices = @transform_11, window_bounds = array<i64: 2, 1, 64>}, {pipeline_mode = #tpu.pipeline_mode<synchronous>, transform_indices = @transform_12, window_bounds = array<i64: 2, 64, 32>}, {pipeline_mode = #tpu.pipeline_mode<synchronous>, transform_indices = @transform_13, window_bounds = array<i64: 2, 1, 32>}, {pipeline_mode = #tpu.pipeline_mode<synchronous>, transform_indices = @transform_14, window_bounds = array<i64: 2, 1, 32>}, {pipeline_mode = #tpu.pipeline_mode<synchronous>, transform_indices = @transform_15, window_bounds = array<i64: 2, 1, 32>}, {pipeline_mode = #tpu.pipeline_mode<synchronous>, transform_indices = @transform_16, window_bounds = array<i64: 32, 128>}, {pipeline_mode = #tpu.pipeline_mode<synchronous>, transform_indices = @transform_17, window_bounds = array<i64: 1, 128>}, {transform_indices = @transform_18, window_bounds = array<i64: 1, 1, 128>}]} {
    %c0 = arith.constant 0 : index
    %c0_0 = arith.constant 0 : index
    %c0_1 = arith.constant 0 : index
    %0 = vector.load %arg1[%c0, %c0_0, %c0_1] : memref<1x8x32xf32, #tpu.memory_space<vmem>>, vector<1x8x32xf32>
    %1 = vector.shape_cast %0 : vector<1x8x32xf32> to vector<8x32xf32>
    %c0_2 = arith.constant 0 : index
    %c0_3 = arith.constant 0 : index
    %2 = vector.load %arg3[%c0_2, %c0_3] : memref<1x32xf32, #tpu.memory_space<vmem>>, vector<1x32xf32>
    %c0_4 = arith.constant 0 : index
    %c0_5 = arith.constant 0 : index
    %3 = vector.load %arg4[%c0_4, %c0_5] : memref<1x32xf32, #tpu.memory_space<vmem>>, vector<1x32xf32>
    %cst = arith.constant dense<0.000000e+00> : vector<8xf32>
    %4 = vector.multi_reduction <add>, %1, %cst [1] : vector<8x32xf32> to vector<8xf32>
    %5 = vector.shape_cast %4 : vector<8xf32> to vector<8x1xf32>
    %cst_6 = arith.constant 3.200000e+01 : f32
    %6 = vector.broadcast %cst_6 : f32 to vector<8x1xf32>
    %7 = arith.divf %5, %6 : vector<8x1xf32>
    %8 = vector.broadcast %7 : vector<8x1xf32> to vector<8x32xf32>
    %9 = arith.subf %1, %8 : vector<8x32xf32>
    %10 = arith.mulf %9, %9 : vector<8x32xf32>
    %cst_7 = arith.constant dense<0.000000e+00> : vector<8xf32>
    %11 = vector.multi_reduction <add>, %10, %cst_7 [1] : vector<8x32xf32> to vector<8xf32>
    %12 = vector.shape_cast %11 : vector<8xf32> to vector<8x1xf32>
    %cst_8 = arith.constant 3.200000e+01 : f32
    %13 = vector.broadcast %cst_8 : f32 to vector<8x1xf32>
    %14 = arith.divf %12, %13 : vector<8x1xf32>
    %cst_9 = arith.constant 9.99999996E-13 : f32
    %15 = vector.broadcast %cst_9 : f32 to vector<8x1xf32>
    %16 = arith.addf %14, %15 : vector<8x1xf32>
    %17 = math.rsqrt %16 : vector<8x1xf32>
    %18 = vector.broadcast %17 : vector<8x1xf32> to vector<8x32xf32>
    %19 = arith.mulf %9, %18 : vector<8x32xf32>
    %20 = vector.broadcast %2 : vector<1x32xf32> to vector<8x32xf32>
    %21 = arith.mulf %19, %20 : vector<8x32xf32>
    %22 = vector.broadcast %3 : vector<1x32xf32> to vector<8x32xf32>
    %23 = arith.addf %21, %22 : vector<8x32xf32>
    %c0_10 = arith.constant 0 : index
    %c0_11 = arith.constant 0 : index
    %c0_12 = arith.constant 0 : index
    %24 = vector.load %arg2[%c0_10, %c0_11, %c0_12] : memref<1x1x8xf32, #tpu.memory_space<vmem>>, vector<1x1x8xf32>
    %25 = vector.shape_cast %24 : vector<1x1x8xf32> to vector<1x8xf32>
    %26 = arith.truncf %23 : vector<8x32xf32> to vector<8x32xbf16>
    %c0_13 = arith.constant 0 : index
    %c0_14 = arith.constant 0 : index
    %c0_15 = arith.constant 0 : index
    %27 = vector.load %arg5[%c0_13, %c0_14, %c0_15] : memref<2x32x96xf32, #tpu.memory_space<vmem>>, vector<1x32x96xf32>
    %28 = vector.shape_cast %27 : vector<1x32x96xf32> to vector<32x96xf32>
    %29 = arith.truncf %28 : vector<32x96xf32> to vector<32x96xbf16>
    %cst_16 = arith.constant dense<0.000000e+00> : vector<8x96xf32>
    %30 = tpu.matmul %26, %29, %cst_16 {dimension_numbers = #tpu.dot_dimension_numbers<[1], [0], [0], [1], [0, 0, 1, 1], [], []>} : vector<8x32xbf16>, vector<32x96xbf16>, vector<8x96xf32> -> vector<8x96xf32>
    %c0_17 = arith.constant 0 : index
    %c0_18 = arith.constant 0 : index
    %c0_19 = arith.constant 0 : index
    %31 = vector.load %arg6[%c0_17, %c0_18, %c0_19] : memref<2x1x96xf32, #tpu.memory_space<vmem>>, vector<1x1x96xf32>
    %32 = vector.shape_cast %31 : vector<1x1x96xf32> to vector<1x96xf32>
    %33 = vector.broadcast %32 : vector<1x96xf32> to vector<8x96xf32>
    %34 = arith.addf %30, %33 : vector<8x96xf32>
    %c0_20 = arith.constant 0 : index
    %c0_21 = arith.constant 0 : index
    %c0_22 = arith.constant 0 : index
    %35 = vector.load %arg7[%c0_20, %c0_21, %c0_22] : memref<2x32x32xf32, #tpu.memory_space<vmem>>, vector<1x32x32xf32>
    %36 = vector.shape_cast %35 : vector<1x32x32xf32> to vector<32x32xf32>
    %c0_23 = arith.constant 0 : index
    %c0_24 = arith.constant 0 : index
    %c0_25 = arith.constant 0 : index
    %37 = vector.load %arg8[%c0_23, %c0_24, %c0_25] : memref<2x1x32xf32, #tpu.memory_space<vmem>>, vector<1x1x32xf32>
    %38 = vector.shape_cast %37 : vector<1x1x32xf32> to vector<1x32xf32>
    %39 = vector.extract_strided_slice %34 {offsets = [0, 0], sizes = [8, 16], strides = [1, 1]} : vector<8x96xf32> to vector<8x16xf32>
    %40 = vector.extract_strided_slice %34 {offsets = [0, 32], sizes = [8, 16], strides = [1, 1]} : vector<8x96xf32> to vector<8x16xf32>
    %41 = vector.extract_strided_slice %34 {offsets = [0, 64], sizes = [8, 16], strides = [1, 1]} : vector<8x96xf32> to vector<8x16xf32>
    %42 = arith.truncf %39 : vector<8x16xf32> to vector<8x16xbf16>
    %43 = arith.truncf %40 : vector<8x16xf32> to vector<8x16xbf16>
    %cst_26 = arith.constant dense<0.000000e+00> : vector<8x8xf32>
    %44 = tpu.matmul %42, %43, %cst_26 {dimension_numbers = #tpu.dot_dimension_numbers<[1], [1], [0], [0], [0, 0, 1, 0], [], []>} : vector<8x16xbf16>, vector<8x16xbf16>, vector<8x8xf32> -> vector<8x8xf32>
    %cst_27 = arith.constant 2.500000e-01 : f32
    %45 = vector.broadcast %cst_27 : f32 to vector<8x8xf32>
    %46 = arith.mulf %44, %45 : vector<8x8xf32>
    %47 = vector.broadcast %25 : vector<1x8xf32> to vector<8x8xf32>
    %48 = arith.addf %46, %47 : vector<8x8xf32>
    %cst_28 = arith.constant dense<0xFF800000> : vector<8xf32>
    %49 = vector.multi_reduction <maximumf>, %48, %cst_28 [1] : vector<8x8xf32> to vector<8xf32>
    %50 = vector.shape_cast %49 : vector<8xf32> to vector<8x1xf32>
    %51 = vector.broadcast %50 : vector<8x1xf32> to vector<8x8xf32>
    %52 = arith.subf %48, %51 : vector<8x8xf32>
    %53 = math.exp %52 : vector<8x8xf32>
    %cst_29 = arith.constant dense<0.000000e+00> : vector<8xf32>
    %54 = vector.multi_reduction <add>, %53, %cst_29 [1] : vector<8x8xf32> to vector<8xf32>
    %55 = vector.shape_cast %54 : vector<8xf32> to vector<8x1xf32>
    %56 = tpu.reciprocal %55 {approx = true} : vector<8x1xf32> -> vector<8x1xf32>
    %57 = vector.broadcast %56 : vector<8x1xf32> to vector<8x8xf32>
    %58 = arith.mulf %53, %57 : vector<8x8xf32>
    %59 = arith.truncf %58 : vector<8x8xf32> to vector<8x8xbf16>
    %60 = arith.truncf %41 : vector<8x16xf32> to vector<8x16xbf16>
    %cst_30 = arith.constant dense<0.000000e+00> : vector<8x16xf32>
    %61 = tpu.matmul %59, %60, %cst_30 {dimension_numbers = #tpu.dot_dimension_numbers<[1], [0], [0], [1], [0, 0, 1, 1], [], []>} : vector<8x8xbf16>, vector<8x16xbf16>, vector<8x16xf32> -> vector<8x16xf32>
    %62 = arith.truncf %61 : vector<8x16xf32> to vector<8x16xbf16>
    %63 = vector.extract_strided_slice %36 {offsets = [0, 0], sizes = [16, 32], strides = [1, 1]} : vector<32x32xf32> to vector<16x32xf32>
    %64 = arith.truncf %63 : vector<16x32xf32> to vector<16x32xbf16>
    %cst_31 = arith.constant dense<0.000000e+00> : vector<8x32xf32>
    %65 = tpu.matmul %62, %64, %cst_31 {dimension_numbers = #tpu.dot_dimension_numbers<[1], [0], [0], [1], [0, 0, 1, 1], [], []>} : vector<8x16xbf16>, vector<16x32xbf16>, vector<8x32xf32> -> vector<8x32xf32>
    %66 = vector.broadcast %38 : vector<1x32xf32> to vector<8x32xf32>
    %67 = arith.addf %66, %65 : vector<8x32xf32>
    %68 = vector.extract_strided_slice %34 {offsets = [0, 16], sizes = [8, 16], strides = [1, 1]} : vector<8x96xf32> to vector<8x16xf32>
    %69 = vector.extract_strided_slice %34 {offsets = [0, 48], sizes = [8, 16], strides = [1, 1]} : vector<8x96xf32> to vector<8x16xf32>
    %70 = vector.extract_strided_slice %34 {offsets = [0, 80], sizes = [8, 16], strides = [1, 1]} : vector<8x96xf32> to vector<8x16xf32>
    %71 = arith.truncf %68 : vector<8x16xf32> to vector<8x16xbf16>
    %72 = arith.truncf %69 : vector<8x16xf32> to vector<8x16xbf16>
    %cst_32 = arith.constant dense<0.000000e+00> : vector<8x8xf32>
    %73 = tpu.matmul %71, %72, %cst_32 {dimension_numbers = #tpu.dot_dimension_numbers<[1], [1], [0], [0], [0, 0, 1, 0], [], []>} : vector<8x16xbf16>, vector<8x16xbf16>, vector<8x8xf32> -> vector<8x8xf32>
    %cst_33 = arith.constant 2.500000e-01 : f32
    %74 = vector.broadcast %cst_33 : f32 to vector<8x8xf32>
    %75 = arith.mulf %73, %74 : vector<8x8xf32>
    %76 = vector.broadcast %25 : vector<1x8xf32> to vector<8x8xf32>
    %77 = arith.addf %75, %76 : vector<8x8xf32>
    %cst_34 = arith.constant dense<0xFF800000> : vector<8xf32>
    %78 = vector.multi_reduction <maximumf>, %77, %cst_34 [1] : vector<8x8xf32> to vector<8xf32>
    %79 = vector.shape_cast %78 : vector<8xf32> to vector<8x1xf32>
    %80 = vector.broadcast %79 : vector<8x1xf32> to vector<8x8xf32>
    %81 = arith.subf %77, %80 : vector<8x8xf32>
    %82 = math.exp %81 : vector<8x8xf32>
    %cst_35 = arith.constant dense<0.000000e+00> : vector<8xf32>
    %83 = vector.multi_reduction <add>, %82, %cst_35 [1] : vector<8x8xf32> to vector<8xf32>
    %84 = vector.shape_cast %83 : vector<8xf32> to vector<8x1xf32>
    %85 = tpu.reciprocal %84 {approx = true} : vector<8x1xf32> -> vector<8x1xf32>
    %86 = vector.broadcast %85 : vector<8x1xf32> to vector<8x8xf32>
    %87 = arith.mulf %82, %86 : vector<8x8xf32>
    %88 = arith.truncf %87 : vector<8x8xf32> to vector<8x8xbf16>
    %89 = arith.truncf %70 : vector<8x16xf32> to vector<8x16xbf16>
    %cst_36 = arith.constant dense<0.000000e+00> : vector<8x16xf32>
    %90 = tpu.matmul %88, %89, %cst_36 {dimension_numbers = #tpu.dot_dimension_numbers<[1], [0], [0], [1], [0, 0, 1, 1], [], []>} : vector<8x8xbf16>, vector<8x16xbf16>, vector<8x16xf32> -> vector<8x16xf32>
    %91 = arith.truncf %90 : vector<8x16xf32> to vector<8x16xbf16>
    %92 = vector.extract_strided_slice %36 {offsets = [16, 0], sizes = [16, 32], strides = [1, 1]} : vector<32x32xf32> to vector<16x32xf32>
    %93 = arith.truncf %92 : vector<16x32xf32> to vector<16x32xbf16>
    %cst_37 = arith.constant dense<0.000000e+00> : vector<8x32xf32>
    %94 = tpu.matmul %91, %93, %cst_37 {dimension_numbers = #tpu.dot_dimension_numbers<[1], [0], [0], [1], [0, 0, 1, 1], [], []>} : vector<8x16xbf16>, vector<16x32xbf16>, vector<8x32xf32> -> vector<8x32xf32>
    %95 = arith.addf %67, %94 : vector<8x32xf32>
    %96 = arith.addf %23, %95 : vector<8x32xf32>
    %c0_38 = arith.constant 0 : index
    %c0_39 = arith.constant 0 : index
    %c0_40 = arith.constant 0 : index
    %97 = vector.load %arg9[%c0_38, %c0_39, %c0_40] : memref<2x1x32xf32, #tpu.memory_space<vmem>>, vector<1x1x32xf32>
    %98 = vector.shape_cast %97 : vector<1x1x32xf32> to vector<1x32xf32>
    %c0_41 = arith.constant 0 : index
    %c0_42 = arith.constant 0 : index
    %c0_43 = arith.constant 0 : index
    %99 = vector.load %arg10[%c0_41, %c0_42, %c0_43] : memref<2x1x32xf32, #tpu.memory_space<vmem>>, vector<1x1x32xf32>
    %100 = vector.shape_cast %99 : vector<1x1x32xf32> to vector<1x32xf32>
    %cst_44 = arith.constant dense<0.000000e+00> : vector<8xf32>
    %101 = vector.multi_reduction <add>, %96, %cst_44 [1] : vector<8x32xf32> to vector<8xf32>
    %102 = vector.shape_cast %101 : vector<8xf32> to vector<8x1xf32>
    %cst_45 = arith.constant 3.200000e+01 : f32
    %103 = vector.broadcast %cst_45 : f32 to vector<8x1xf32>
    %104 = arith.divf %102, %103 : vector<8x1xf32>
    %105 = vector.broadcast %104 : vector<8x1xf32> to vector<8x32xf32>
    %106 = arith.subf %96, %105 : vector<8x32xf32>
    %107 = arith.mulf %106, %106 : vector<8x32xf32>
    %cst_46 = arith.constant dense<0.000000e+00> : vector<8xf32>
    %108 = vector.multi_reduction <add>, %107, %cst_46 [1] : vector<8x32xf32> to vector<8xf32>
    %109 = vector.shape_cast %108 : vector<8xf32> to vector<8x1xf32>
    %cst_47 = arith.constant 3.200000e+01 : f32
    %110 = vector.broadcast %cst_47 : f32 to vector<8x1xf32>
    %111 = arith.divf %109, %110 : vector<8x1xf32>
    %cst_48 = arith.constant 9.99999996E-13 : f32
    %112 = vector.broadcast %cst_48 : f32 to vector<8x1xf32>
    %113 = arith.addf %111, %112 : vector<8x1xf32>
    %114 = math.rsqrt %113 : vector<8x1xf32>
    %115 = vector.broadcast %114 : vector<8x1xf32> to vector<8x32xf32>
    %116 = arith.mulf %106, %115 : vector<8x32xf32>
    %117 = vector.broadcast %98 : vector<1x32xf32> to vector<8x32xf32>
    %118 = arith.mulf %116, %117 : vector<8x32xf32>
    %119 = vector.broadcast %100 : vector<1x32xf32> to vector<8x32xf32>
    %120 = arith.addf %118, %119 : vector<8x32xf32>
    %121 = arith.truncf %120 : vector<8x32xf32> to vector<8x32xbf16>
    %c0_49 = arith.constant 0 : index
    %c0_50 = arith.constant 0 : index
    %c0_51 = arith.constant 0 : index
    %122 = vector.load %arg11[%c0_49, %c0_50, %c0_51] : memref<2x32x64xf32, #tpu.memory_space<vmem>>, vector<1x32x64xf32>
    %123 = vector.shape_cast %122 : vector<1x32x64xf32> to vector<32x64xf32>
    %124 = arith.truncf %123 : vector<32x64xf32> to vector<32x64xbf16>
    %cst_52 = arith.constant dense<0.000000e+00> : vector<8x64xf32>
    %125 = tpu.matmul %121, %124, %cst_52 {dimension_numbers = #tpu.dot_dimension_numbers<[1], [0], [0], [1], [0, 0, 1, 1], [], []>} : vector<8x32xbf16>, vector<32x64xbf16>, vector<8x64xf32> -> vector<8x64xf32>
    %c0_53 = arith.constant 0 : index
    %c0_54 = arith.constant 0 : index
    %c0_55 = arith.constant 0 : index
    %126 = vector.load %arg12[%c0_53, %c0_54, %c0_55] : memref<2x1x64xf32, #tpu.memory_space<vmem>>, vector<1x1x64xf32>
    %127 = vector.shape_cast %126 : vector<1x1x64xf32> to vector<1x64xf32>
    %128 = vector.broadcast %127 : vector<1x64xf32> to vector<8x64xf32>
    %129 = arith.addf %125, %128 : vector<8x64xf32>
    %cst_56 = arith.constant 5.000000e-01 : f32
    %130 = vector.broadcast %cst_56 : f32 to vector<8x64xf32>
    %131 = arith.mulf %130, %129 : vector<8x64xf32>
    %cst_57 = arith.constant 4.471500e-02 : f32
    %132 = vector.broadcast %cst_57 : f32 to vector<8x64xf32>
    %133 = arith.mulf %132, %129 : vector<8x64xf32>
    %134 = arith.mulf %133, %129 : vector<8x64xf32>
    %135 = arith.mulf %134, %129 : vector<8x64xf32>
    %136 = arith.addf %129, %135 : vector<8x64xf32>
    %cst_58 = arith.constant 0.797884583 : f32
    %137 = vector.broadcast %cst_58 : f32 to vector<8x64xf32>
    %138 = arith.mulf %137, %136 : vector<8x64xf32>
    %139 = math.tanh %138 : vector<8x64xf32>
    %cst_59 = arith.constant 1.000000e+00 : f32
    %140 = vector.broadcast %cst_59 : f32 to vector<8x64xf32>
    %141 = arith.addf %140, %139 : vector<8x64xf32>
    %142 = arith.mulf %131, %141 : vector<8x64xf32>
    %143 = arith.truncf %142 : vector<8x64xf32> to vector<8x64xbf16>
    %c0_60 = arith.constant 0 : index
    %c0_61 = arith.constant 0 : index
    %c0_62 = arith.constant 0 : index
    %144 = vector.load %arg13[%c0_60, %c0_61, %c0_62] : memref<2x64x32xf32, #tpu.memory_space<vmem>>, vector<1x64x32xf32>
    %145 = vector.shape_cast %144 : vector<1x64x32xf32> to vector<64x32xf32>
    %146 = arith.truncf %145 : vector<64x32xf32> to vector<64x32xbf16>
    %cst_63 = arith.constant dense<0.000000e+00> : vector<8x32xf32>
    %147 = tpu.matmul %143, %146, %cst_63 {dimension_numbers = #tpu.dot_dimension_numbers<[1], [0], [0], [1], [0, 0, 1, 1], [], []>} : vector<8x64xbf16>, vector<64x32xbf16>, vector<8x32xf32> -> vector<8x32xf32>
    %c0_64 = arith.constant 0 : index
    %c0_65 = arith.constant 0 : index
    %c0_66 = arith.constant 0 : index
    %148 = vector.load %arg14[%c0_64, %c0_65, %c0_66] : memref<2x1x32xf32, #tpu.memory_space<vmem>>, vector<1x1x32xf32>
    %149 = vector.shape_cast %148 : vector<1x1x32xf32> to vector<1x32xf32>
    %150 = vector.broadcast %149 : vector<1x32xf32> to vector<8x32xf32>
    %151 = arith.addf %147, %150 : vector<8x32xf32>
    %152 = arith.addf %120, %151 : vector<8x32xf32>
    %c0_67 = arith.constant 0 : index
    %c0_68 = arith.constant 0 : index
    %c0_69 = arith.constant 0 : index
    %153 = vector.load %arg15[%c0_67, %c0_68, %c0_69] : memref<2x1x32xf32, #tpu.memory_space<vmem>>, vector<1x1x32xf32>
    %154 = vector.shape_cast %153 : vector<1x1x32xf32> to vector<1x32xf32>
    %c0_70 = arith.constant 0 : index
    %c0_71 = arith.constant 0 : index
    %c0_72 = arith.constant 0 : index
    %155 = vector.load %arg16[%c0_70, %c0_71, %c0_72] : memref<2x1x32xf32, #tpu.memory_space<vmem>>, vector<1x1x32xf32>
    %156 = vector.shape_cast %155 : vector<1x1x32xf32> to vector<1x32xf32>
    %cst_73 = arith.constant dense<0.000000e+00> : vector<8xf32>
    %157 = vector.multi_reduction <add>, %152, %cst_73 [1] : vector<8x32xf32> to vector<8xf32>
    %158 = vector.shape_cast %157 : vector<8xf32> to vector<8x1xf32>
    %cst_74 = arith.constant 3.200000e+01 : f32
    %159 = vector.broadcast %cst_74 : f32 to vector<8x1xf32>
    %160 = arith.divf %158, %159 : vector<8x1xf32>
    %161 = vector.broadcast %160 : vector<8x1xf32> to vector<8x32xf32>
    %162 = arith.subf %152, %161 : vector<8x32xf32>
    %163 = arith.mulf %162, %162 : vector<8x32xf32>
    %cst_75 = arith.constant dense<0.000000e+00> : vector<8xf32>
    %164 = vector.multi_reduction <add>, %163, %cst_75 [1] : vector<8x32xf32> to vector<8xf32>
    %165 = vector.shape_cast %164 : vector<8xf32> to vector<8x1xf32>
    %cst_76 = arith.constant 3.200000e+01 : f32
    %166 = vector.broadcast %cst_76 : f32 to vector<8x1xf32>
    %167 = arith.divf %165, %166 : vector<8x1xf32>
    %cst_77 = arith.constant 9.99999996E-13 : f32
    %168 = vector.broadcast %cst_77 : f32 to vector<8x1xf32>
    %169 = arith.addf %167, %168 : vector<8x1xf32>
    %170 = math.rsqrt %169 : vector<8x1xf32>
    %171 = vector.broadcast %170 : vector<8x1xf32> to vector<8x32xf32>
    %172 = arith.mulf %162, %171 : vector<8x32xf32>
    %173 = vector.broadcast %154 : vector<1x32xf32> to vector<8x32xf32>
    %174 = arith.mulf %172, %173 : vector<8x32xf32>
    %175 = vector.broadcast %156 : vector<1x32xf32> to vector<8x32xf32>
    %176 = arith.addf %174, %175 : vector<8x32xf32>
    %177 = arith.truncf %176 : vector<8x32xf32> to vector<8x32xbf16>
    %c1 = arith.constant 1 : index
    %c0_78 = arith.constant 0 : index
    %c0_79 = arith.constant 0 : index
    %178 = vector.load %arg5[%c1, %c0_78, %c0_79] : memref<2x32x96xf32, #tpu.memory_space<vmem>>, vector<1x32x96xf32>
    %179 = vector.shape_cast %178 : vector<1x32x96xf32> to vector<32x96xf32>
    %180 = arith.truncf %179 : vector<32x96xf32> to vector<32x96xbf16>
    %cst_80 = arith.constant dense<0.000000e+00> : vector<8x96xf32>
    %181 = tpu.matmul %177, %180, %cst_80 {dimension_numbers = #tpu.dot_dimension_numbers<[1], [0], [0], [1], [0, 0, 1, 1], [], []>} : vector<8x32xbf16>, vector<32x96xbf16>, vector<8x96xf32> -> vector<8x96xf32>
    %c1_81 = arith.constant 1 : index
    %c0_82 = arith.constant 0 : index
    %c0_83 = arith.constant 0 : index
    %182 = vector.load %arg6[%c1_81, %c0_82, %c0_83] : memref<2x1x96xf32, #tpu.memory_space<vmem>>, vector<1x1x96xf32>
    %183 = vector.shape_cast %182 : vector<1x1x96xf32> to vector<1x96xf32>
    %184 = vector.broadcast %183 : vector<1x96xf32> to vector<8x96xf32>
    %185 = arith.addf %181, %184 : vector<8x96xf32>
    %c1_84 = arith.constant 1 : index
    %c0_85 = arith.constant 0 : index
    %c0_86 = arith.constant 0 : index
    %186 = vector.load %arg7[%c1_84, %c0_85, %c0_86] : memref<2x32x32xf32, #tpu.memory_space<vmem>>, vector<1x32x32xf32>
    %187 = vector.shape_cast %186 : vector<1x32x32xf32> to vector<32x32xf32>
    %c1_87 = arith.constant 1 : index
    %c0_88 = arith.constant 0 : index
    %c0_89 = arith.constant 0 : index
    %188 = vector.load %arg8[%c1_87, %c0_88, %c0_89] : memref<2x1x32xf32, #tpu.memory_space<vmem>>, vector<1x1x32xf32>
    %189 = vector.shape_cast %188 : vector<1x1x32xf32> to vector<1x32xf32>
    %190 = vector.extract_strided_slice %185 {offsets = [0, 0], sizes = [8, 16], strides = [1, 1]} : vector<8x96xf32> to vector<8x16xf32>
    %191 = vector.extract_strided_slice %185 {offsets = [0, 32], sizes = [8, 16], strides = [1, 1]} : vector<8x96xf32> to vector<8x16xf32>
    %192 = vector.extract_strided_slice %185 {offsets = [0, 64], sizes = [8, 16], strides = [1, 1]} : vector<8x96xf32> to vector<8x16xf32>
    %193 = arith.truncf %190 : vector<8x16xf32> to vector<8x16xbf16>
    %194 = arith.truncf %191 : vector<8x16xf32> to vector<8x16xbf16>
    %cst_90 = arith.constant dense<0.000000e+00> : vector<8x8xf32>
    %195 = tpu.matmul %193, %194, %cst_90 {dimension_numbers = #tpu.dot_dimension_numbers<[1], [1], [0], [0], [0, 0, 1, 0], [], []>} : vector<8x16xbf16>, vector<8x16xbf16>, vector<8x8xf32> -> vector<8x8xf32>
    %cst_91 = arith.constant 2.500000e-01 : f32
    %196 = vector.broadcast %cst_91 : f32 to vector<8x8xf32>
    %197 = arith.mulf %195, %196 : vector<8x8xf32>
    %198 = vector.broadcast %25 : vector<1x8xf32> to vector<8x8xf32>
    %199 = arith.addf %197, %198 : vector<8x8xf32>
    %cst_92 = arith.constant dense<0xFF800000> : vector<8xf32>
    %200 = vector.multi_reduction <maximumf>, %199, %cst_92 [1] : vector<8x8xf32> to vector<8xf32>
    %201 = vector.shape_cast %200 : vector<8xf32> to vector<8x1xf32>
    %202 = vector.broadcast %201 : vector<8x1xf32> to vector<8x8xf32>
    %203 = arith.subf %199, %202 : vector<8x8xf32>
    %204 = math.exp %203 : vector<8x8xf32>
    %cst_93 = arith.constant dense<0.000000e+00> : vector<8xf32>
    %205 = vector.multi_reduction <add>, %204, %cst_93 [1] : vector<8x8xf32> to vector<8xf32>
    %206 = vector.shape_cast %205 : vector<8xf32> to vector<8x1xf32>
    %207 = tpu.reciprocal %206 {approx = true} : vector<8x1xf32> -> vector<8x1xf32>
    %208 = vector.broadcast %207 : vector<8x1xf32> to vector<8x8xf32>
    %209 = arith.mulf %204, %208 : vector<8x8xf32>
    %210 = arith.truncf %209 : vector<8x8xf32> to vector<8x8xbf16>
    %211 = arith.truncf %192 : vector<8x16xf32> to vector<8x16xbf16>
    %cst_94 = arith.constant dense<0.000000e+00> : vector<8x16xf32>
    %212 = tpu.matmul %210, %211, %cst_94 {dimension_numbers = #tpu.dot_dimension_numbers<[1], [0], [0], [1], [0, 0, 1, 1], [], []>} : vector<8x8xbf16>, vector<8x16xbf16>, vector<8x16xf32> -> vector<8x16xf32>
    %213 = arith.truncf %212 : vector<8x16xf32> to vector<8x16xbf16>
    %214 = vector.extract_strided_slice %187 {offsets = [0, 0], sizes = [16, 32], strides = [1, 1]} : vector<32x32xf32> to vector<16x32xf32>
    %215 = arith.truncf %214 : vector<16x32xf32> to vector<16x32xbf16>
    %cst_95 = arith.constant dense<0.000000e+00> : vector<8x32xf32>
    %216 = tpu.matmul %213, %215, %cst_95 {dimension_numbers = #tpu.dot_dimension_numbers<[1], [0], [0], [1], [0, 0, 1, 1], [], []>} : vector<8x16xbf16>, vector<16x32xbf16>, vector<8x32xf32> -> vector<8x32xf32>
    %217 = vector.broadcast %189 : vector<1x32xf32> to vector<8x32xf32>
    %218 = arith.addf %217, %216 : vector<8x32xf32>
    %219 = vector.extract_strided_slice %185 {offsets = [0, 16], sizes = [8, 16], strides = [1, 1]} : vector<8x96xf32> to vector<8x16xf32>
    %220 = vector.extract_strided_slice %185 {offsets = [0, 48], sizes = [8, 16], strides = [1, 1]} : vector<8x96xf32> to vector<8x16xf32>
    %221 = vector.extract_strided_slice %185 {offsets = [0, 80], sizes = [8, 16], strides = [1, 1]} : vector<8x96xf32> to vector<8x16xf32>
    %222 = arith.truncf %219 : vector<8x16xf32> to vector<8x16xbf16>
    %223 = arith.truncf %220 : vector<8x16xf32> to vector<8x16xbf16>
    %cst_96 = arith.constant dense<0.000000e+00> : vector<8x8xf32>
    %224 = tpu.matmul %222, %223, %cst_96 {dimension_numbers = #tpu.dot_dimension_numbers<[1], [1], [0], [0], [0, 0, 1, 0], [], []>} : vector<8x16xbf16>, vector<8x16xbf16>, vector<8x8xf32> -> vector<8x8xf32>
    %cst_97 = arith.constant 2.500000e-01 : f32
    %225 = vector.broadcast %cst_97 : f32 to vector<8x8xf32>
    %226 = arith.mulf %224, %225 : vector<8x8xf32>
    %227 = vector.broadcast %25 : vector<1x8xf32> to vector<8x8xf32>
    %228 = arith.addf %226, %227 : vector<8x8xf32>
    %cst_98 = arith.constant dense<0xFF800000> : vector<8xf32>
    %229 = vector.multi_reduction <maximumf>, %228, %cst_98 [1] : vector<8x8xf32> to vector<8xf32>
    %230 = vector.shape_cast %229 : vector<8xf32> to vector<8x1xf32>
    %231 = vector.broadcast %230 : vector<8x1xf32> to vector<8x8xf32>
    %232 = arith.subf %228, %231 : vector<8x8xf32>
    %233 = math.exp %232 : vector<8x8xf32>
    %cst_99 = arith.constant dense<0.000000e+00> : vector<8xf32>
    %234 = vector.multi_reduction <add>, %233, %cst_99 [1] : vector<8x8xf32> to vector<8xf32>
    %235 = vector.shape_cast %234 : vector<8xf32> to vector<8x1xf32>
    %236 = tpu.reciprocal %235 {approx = true} : vector<8x1xf32> -> vector<8x1xf32>
    %237 = vector.broadcast %236 : vector<8x1xf32> to vector<8x8xf32>
    %238 = arith.mulf %233, %237 : vector<8x8xf32>
    %239 = arith.truncf %238 : vector<8x8xf32> to vector<8x8xbf16>
    %240 = arith.truncf %221 : vector<8x16xf32> to vector<8x16xbf16>
    %cst_100 = arith.constant dense<0.000000e+00> : vector<8x16xf32>
    %241 = tpu.matmul %239, %240, %cst_100 {dimension_numbers = #tpu.dot_dimension_numbers<[1], [0], [0], [1], [0, 0, 1, 1], [], []>} : vector<8x8xbf16>, vector<8x16xbf16>, vector<8x16xf32> -> vector<8x16xf32>
    %242 = arith.truncf %241 : vector<8x16xf32> to vector<8x16xbf16>
    %243 = vector.extract_strided_slice %187 {offsets = [16, 0], sizes = [16, 32], strides = [1, 1]} : vector<32x32xf32> to vector<16x32xf32>
    %244 = arith.truncf %243 : vector<16x32xf32> to vector<16x32xbf16>
    %cst_101 = arith.constant dense<0.000000e+00> : vector<8x32xf32>
    %245 = tpu.matmul %242, %244, %cst_101 {dimension_numbers = #tpu.dot_dimension_numbers<[1], [0], [0], [1], [0, 0, 1, 1], [], []>} : vector<8x16xbf16>, vector<16x32xbf16>, vector<8x32xf32> -> vector<8x32xf32>
    %246 = arith.addf %218, %245 : vector<8x32xf32>
    %247 = arith.addf %176, %246 : vector<8x32xf32>
    %c1_102 = arith.constant 1 : index
    %c0_103 = arith.constant 0 : index
    %c0_104 = arith.constant 0 : index
    %248 = vector.load %arg9[%c1_102, %c0_103, %c0_104] : memref<2x1x32xf32, #tpu.memory_space<vmem>>, vector<1x1x32xf32>
    %249 = vector.shape_cast %248 : vector<1x1x32xf32> to vector<1x32xf32>
    %c1_105 = arith.constant 1 : index
    %c0_106 = arith.constant 0 : index
    %c0_107 = arith.constant 0 : index
    %250 = vector.load %arg10[%c1_105, %c0_106, %c0_107] : memref<2x1x32xf32, #tpu.memory_space<vmem>>, vector<1x1x32xf32>
    %251 = vector.shape_cast %250 : vector<1x1x32xf32> to vector<1x32xf32>
    %cst_108 = arith.constant dense<0.000000e+00> : vector<8xf32>
    %252 = vector.multi_reduction <add>, %247, %cst_108 [1] : vector<8x32xf32> to vector<8xf32>
    %253 = vector.shape_cast %252 : vector<8xf32> to vector<8x1xf32>
    %cst_109 = arith.constant 3.200000e+01 : f32
    %254 = vector.broadcast %cst_109 : f32 to vector<8x1xf32>
    %255 = arith.divf %253, %254 : vector<8x1xf32>
    %256 = vector.broadcast %255 : vector<8x1xf32> to vector<8x32xf32>
    %257 = arith.subf %247, %256 : vector<8x32xf32>
    %258 = arith.mulf %257, %257 : vector<8x32xf32>
    %cst_110 = arith.constant dense<0.000000e+00> : vector<8xf32>
    %259 = vector.multi_reduction <add>, %258, %cst_110 [1] : vector<8x32xf32> to vector<8xf32>
    %260 = vector.shape_cast %259 : vector<8xf32> to vector<8x1xf32>
    %cst_111 = arith.constant 3.200000e+01 : f32
    %261 = vector.broadcast %cst_111 : f32 to vector<8x1xf32>
    %262 = arith.divf %260, %261 : vector<8x1xf32>
    %cst_112 = arith.constant 9.99999996E-13 : f32
    %263 = vector.broadcast %cst_112 : f32 to vector<8x1xf32>
    %264 = arith.addf %262, %263 : vector<8x1xf32>
    %265 = math.rsqrt %264 : vector<8x1xf32>
    %266 = vector.broadcast %265 : vector<8x1xf32> to vector<8x32xf32>
    %267 = arith.mulf %257, %266 : vector<8x32xf32>
    %268 = vector.broadcast %249 : vector<1x32xf32> to vector<8x32xf32>
    %269 = arith.mulf %267, %268 : vector<8x32xf32>
    %270 = vector.broadcast %251 : vector<1x32xf32> to vector<8x32xf32>
    %271 = arith.addf %269, %270 : vector<8x32xf32>
    %272 = arith.truncf %271 : vector<8x32xf32> to vector<8x32xbf16>
    %c1_113 = arith.constant 1 : index
    %c0_114 = arith.constant 0 : index
    %c0_115 = arith.constant 0 : index
    %273 = vector.load %arg11[%c1_113, %c0_114, %c0_115] : memref<2x32x64xf32, #tpu.memory_space<vmem>>, vector<1x32x64xf32>
    %274 = vector.shape_cast %273 : vector<1x32x64xf32> to vector<32x64xf32>
    %275 = arith.truncf %274 : vector<32x64xf32> to vector<32x64xbf16>
    %cst_116 = arith.constant dense<0.000000e+00> : vector<8x64xf32>
    %276 = tpu.matmul %272, %275, %cst_116 {dimension_numbers = #tpu.dot_dimension_numbers<[1], [0], [0], [1], [0, 0, 1, 1], [], []>} : vector<8x32xbf16>, vector<32x64xbf16>, vector<8x64xf32> -> vector<8x64xf32>
    %c1_117 = arith.constant 1 : index
    %c0_118 = arith.constant 0 : index
    %c0_119 = arith.constant 0 : index
    %277 = vector.load %arg12[%c1_117, %c0_118, %c0_119] : memref<2x1x64xf32, #tpu.memory_space<vmem>>, vector<1x1x64xf32>
    %278 = vector.shape_cast %277 : vector<1x1x64xf32> to vector<1x64xf32>
    %279 = vector.broadcast %278 : vector<1x64xf32> to vector<8x64xf32>
    %280 = arith.addf %276, %279 : vector<8x64xf32>
    %cst_120 = arith.constant 5.000000e-01 : f32
    %281 = vector.broadcast %cst_120 : f32 to vector<8x64xf32>
    %282 = arith.mulf %281, %280 : vector<8x64xf32>
    %cst_121 = arith.constant 4.471500e-02 : f32
    %283 = vector.broadcast %cst_121 : f32 to vector<8x64xf32>
    %284 = arith.mulf %283, %280 : vector<8x64xf32>
    %285 = arith.mulf %284, %280 : vector<8x64xf32>
    %286 = arith.mulf %285, %280 : vector<8x64xf32>
    %287 = arith.addf %280, %286 : vector<8x64xf32>
    %cst_122 = arith.constant 0.797884583 : f32
    %288 = vector.broadcast %cst_122 : f32 to vector<8x64xf32>
    %289 = arith.mulf %288, %287 : vector<8x64xf32>
    %290 = math.tanh %289 : vector<8x64xf32>
    %cst_123 = arith.constant 1.000000e+00 : f32
    %291 = vector.broadcast %cst_123 : f32 to vector<8x64xf32>
    %292 = arith.addf %291, %290 : vector<8x64xf32>
    %293 = arith.mulf %282, %292 : vector<8x64xf32>
    %294 = arith.truncf %293 : vector<8x64xf32> to vector<8x64xbf16>
    %c1_124 = arith.constant 1 : index
    %c0_125 = arith.constant 0 : index
    %c0_126 = arith.constant 0 : index
    %295 = vector.load %arg13[%c1_124, %c0_125, %c0_126] : memref<2x64x32xf32, #tpu.memory_space<vmem>>, vector<1x64x32xf32>
    %296 = vector.shape_cast %295 : vector<1x64x32xf32> to vector<64x32xf32>
    %297 = arith.truncf %296 : vector<64x32xf32> to vector<64x32xbf16>
    %cst_127 = arith.constant dense<0.000000e+00> : vector<8x32xf32>
    %298 = tpu.matmul %294, %297, %cst_127 {dimension_numbers = #tpu.dot_dimension_numbers<[1], [0], [0], [1], [0, 0, 1, 1], [], []>} : vector<8x64xbf16>, vector<64x32xbf16>, vector<8x32xf32> -> vector<8x32xf32>
    %c1_128 = arith.constant 1 : index
    %c0_129 = arith.constant 0 : index
    %c0_130 = arith.constant 0 : index
    %299 = vector.load %arg14[%c1_128, %c0_129, %c0_130] : memref<2x1x32xf32, #tpu.memory_space<vmem>>, vector<1x1x32xf32>
    %300 = vector.shape_cast %299 : vector<1x1x32xf32> to vector<1x32xf32>
    %301 = vector.broadcast %300 : vector<1x32xf32> to vector<8x32xf32>
    %302 = arith.addf %298, %301 : vector<8x32xf32>
    %303 = arith.addf %271, %302 : vector<8x32xf32>
    %c1_131 = arith.constant 1 : index
    %c0_132 = arith.constant 0 : index
    %c0_133 = arith.constant 0 : index
    %304 = vector.load %arg15[%c1_131, %c0_132, %c0_133] : memref<2x1x32xf32, #tpu.memory_space<vmem>>, vector<1x1x32xf32>
    %305 = vector.shape_cast %304 : vector<1x1x32xf32> to vector<1x32xf32>
    %c1_134 = arith.constant 1 : index
    %c0_135 = arith.constant 0 : index
    %c0_136 = arith.constant 0 : index
    %306 = vector.load %arg16[%c1_134, %c0_135, %c0_136] : memref<2x1x32xf32, #tpu.memory_space<vmem>>, vector<1x1x32xf32>
    %307 = vector.shape_cast %306 : vector<1x1x32xf32> to vector<1x32xf32>
    %cst_137 = arith.constant dense<0.000000e+00> : vector<8xf32>
    %308 = vector.multi_reduction <add>, %303, %cst_137 [1] : vector<8x32xf32> to vector<8xf32>
    %309 = vector.shape_cast %308 : vector<8xf32> to vector<8x1xf32>
    %cst_138 = arith.constant 3.200000e+01 : f32
    %310 = vector.broadcast %cst_138 : f32 to vector<8x1xf32>
    %311 = arith.divf %309, %310 : vector<8x1xf32>
    %312 = vector.broadcast %311 : vector<8x1xf32> to vector<8x32xf32>
    %313 = arith.subf %303, %312 : vector<8x32xf32>
    %314 = arith.mulf %313, %313 : vector<8x32xf32>
    %cst_139 = arith.constant dense<0.000000e+00> : vector<8xf32>
    %315 = vector.multi_reduction <add>, %314, %cst_139 [1] : vector<8x32xf32> to vector<8xf32>
    %316 = vector.shape_cast %315 : vector<8xf32> to vector<8x1xf32>
    %cst_140 = arith.constant 3.200000e+01 : f32
    %317 = vector.broadcast %cst_140 : f32 to vector<8x1xf32>
    %318 = arith.divf %316, %317 : vector<8x1xf32>
    %cst_141 = arith.constant 9.99999996E-13 : f32
    %319 = vector.broadcast %cst_141 : f32 to vector<8x1xf32>
    %320 = arith.addf %318, %319 : vector<8x1xf32>
    %321 = math.rsqrt %320 : vector<8x1xf32>
    %322 = vector.broadcast %321 : vector<8x1xf32> to vector<8x32xf32>
    %323 = arith.mulf %313, %322 : vector<8x32xf32>
    %324 = vector.broadcast %305 : vector<1x32xf32> to vector<8x32xf32>
    %325 = arith.mulf %323, %324 : vector<8x32xf32>
    %326 = vector.broadcast %307 : vector<1x32xf32> to vector<8x32xf32>
    %327 = arith.addf %325, %326 : vector<8x32xf32>
    %328 = vector.extract_strided_slice %327 {offsets = [0, 0], sizes = [1, 32], strides = [1, 1]} : vector<8x32xf32> to vector<1x32xf32>
    %329 = arith.truncf %328 : vector<1x32xf32> to vector<1x32xbf16>
    %c0_142 = arith.constant 0 : index
    %c0_143 = arith.constant 0 : index
    %330 = vector.load %arg17[%c0_142, %c0_143] : memref<32x128xf32, #tpu.memory_space<vmem>>, vector<32x128xf32>
    %331 = arith.truncf %330 : vector<32x128xf32> to vector<32x128xbf16>
    %cst_144 = arith.constant dense<0.000000e+00> : vector<1x128xf32>
    %332 = tpu.matmul %329, %331, %cst_144 {dimension_numbers = #tpu.dot_dimension_numbers<[1], [0], [0], [1], [0, 0, 1, 1], [], []>} : vector<1x32xbf16>, vector<32x128xbf16>, vector<1x128xf32> -> vector<1x128xf32>
    %c0_145 = arith.constant 0 : index
    %c0_146 = arith.constant 0 : index
    %333 = vector.load %arg18[%c0_145, %c0_146] : memref<1x128xf32, #tpu.memory_space<vmem>>, vector<1x128xf32>
    %334 = arith.addf %332, %333 : vector<1x128xf32>
    %c0_147 = arith.constant 0 : index
    %c0_148 = arith.constant 0 : index
    %c0_149 = arith.constant 0 : index
    %335 = vector.load %arg19[%c0_147, %c0_148, %c0_149] : memref<1x1x128xf32, #tpu.memory_space<vmem>>, vector<1x1x128xf32>
    %336 = vector.shape_cast %335 : vector<1x1x128xf32> to vector<1x128xf32>
    %337 = vector.shape_cast %334 : vector<1x128xf32> to vector<1x1x128xf32>
    tpu.vector_store %arg19[%c0_147, %c0_148, %c0_149], %337 {strides = array<i32>} : memref<1x1x128xf32, #tpu.memory_space<vmem>>, vector<1x1x128xf32>,
    return
  }
  func.func @transform_0(%arg0: i32) -> (i32, i32, i32) {
    %c0_i32 = arith.constant 0 : i32
    %c0_i32_0 = arith.constant 0 : i32
    %c0_i32_1 = arith.constant 0 : i32
    return %arg0, %c0_i32, %c0_i32_0 : i32, i32, i32
  }
  func.func @transform_1(%arg0: i32) -> (i32, i32, i32) {
    %c0_i32 = arith.constant 0 : i32
    %c0_i32_0 = arith.constant 0 : i32
    %c0_i32_1 = arith.constant 0 : i32
    return %arg0, %c0_i32, %c0_i32_0 : i32, i32, i32
  }
  func.func @transform_2(%arg0: i32) -> (i32, i32) {
    %c0_i32 = arith.constant 0 : i32
    %c0_i32_0 = arith.constant 0 : i32
    %c0_i32_1 = arith.constant 0 : i32
    return %c0_i32, %c0_i32_0 : i32, i32
  }
  func.func @transform_3(%arg0: i32) -> (i32, i32) {
    %c0_i32 = arith.constant 0 : i32
    %c0_i32_0 = arith.constant 0 : i32
    %c0_i32_1 = arith.constant 0 : i32
    return %c0_i32, %c0_i32_0 : i32, i32
  }
  func.func @transform_4(%arg0: i32) -> (i32, i32, i32) {
    %c0_i32 = arith.constant 0 : i32
    %c0_i32_0 = arith.constant 0 : i32
    %c0_i32_1 = arith.constant 0 : i32
    %c0_i32_2 = arith.constant 0 : i32
    return %c0_i32, %c0_i32_0, %c0_i32_1 : i32, i32, i32
  }
  func.func @transform_5(%arg0: i32) -> (i32, i32, i32) {
    %c0_i32 = arith.constant 0 : i32
    %c0_i32_0 = arith.constant 0 : i32
    %c0_i32_1 = arith.constant 0 : i32
    %c0_i32_2 = arith.constant 0 : i32
    return %c0_i32, %c0_i32_0, %c0_i32_1 : i32, i32, i32
  }
  func.func @transform_6(%arg0: i32) -> (i32, i32, i32) {
    %c0_i32 = arith.constant 0 : i32
    %c0_i32_0 = arith.constant 0 : i32
    %c0_i32_1 = arith.constant 0 : i32
    %c0_i32_2 = arith.constant 0 : i32
    return %c0_i32, %c0_i32_0, %c0_i32_1 : i32, i32, i32
  }
  func.func @transform_7(%arg0: i32) -> (i32, i32, i32) {
    %c0_i32 = arith.constant 0 : i32
    %c0_i32_0 = arith.constant 0 : i32
    %c0_i32_1 = arith.constant 0 : i32
    %c0_i32_2 = arith.constant 0 : i32
    return %c0_i32, %c0_i32_0, %c0_i32_1 : i32, i32, i32
  }
  func.func @transform_8(%arg0: i32) -> (i32, i32, i32) {
    %c0_i32 = arith.constant 0 : i32
    %c0_i32_0 = arith.constant 0 : i32
    %c0_i32_1 = arith.constant 0 : i32
    %c0_i32_2 = arith.constant 0 : i32
    return %c0_i32, %c0_i32_0, %c0_i32_1 : i32, i32, i32
  }
  func.func @transform_9(%arg0: i32) -> (i32, i32, i32) {
    %c0_i32 = arith.constant 0 : i32
    %c0_i32_0 = arith.constant 0 : i32
    %c0_i32_1 = arith.constant 0 : i32
    %c0_i32_2 = arith.constant 0 : i32
    return %c0_i32, %c0_i32_0, %c0_i32_1 : i32, i32, i32
  }
  func.func @transform_10(%arg0: i32) -> (i32, i32, i32) {
    %c0_i32 = arith.constant 0 : i32
    %c0_i32_0 = arith.constant 0 : i32
    %c0_i32_1 = arith.constant 0 : i32
    %c0_i32_2 = arith.constant 0 : i32
    return %c0_i32, %c0_i32_0, %c0_i32_1 : i32, i32, i32
  }
  func.func @transform_11(%arg0: i32) -> (i32, i32, i32) {
    %c0_i32 = arith.constant 0 : i32
    %c0_i32_0 = arith.constant 0 : i32
    %c0_i32_1 = arith.constant 0 : i32
    %c0_i32_2 = arith.constant 0 : i32
    return %c0_i32, %c0_i32_0, %c0_i32_1 : i32, i32, i32
  }
  func.func @transform_12(%arg0: i32) -> (i32, i32, i32) {
    %c0_i32 = arith.constant 0 : i32
    %c0_i32_0 = arith.constant 0 : i32
    %c0_i32_1 = arith.constant 0 : i32
    %c0_i32_2 = arith.constant 0 : i32
    return %c0_i32, %c0_i32_0, %c0_i32_1 : i32, i32, i32
  }
  func.func @transform_13(%arg0: i32) -> (i32, i32, i32) {
    %c0_i32 = arith.constant 0 : i32
    %c0_i32_0 = arith.constant 0 : i32
    %c0_i32_1 = arith.constant 0 : i32
    %c0_i32_2 = arith.constant 0 : i32
    return %c0_i32, %c0_i32_0, %c0_i32_1 : i32, i32, i32
  }
  func.func @transform_14(%arg0: i32) -> (i32, i32, i32) {
    %c0_i32 = arith.constant 0 : i32
    %c0_i32_0 = arith.constant 0 : i32
    %c0_i32_1 = arith.constant 0 : i32
    %c0_i32_2 = arith.constant 0 : i32
    return %c0_i32, %c0_i32_0, %c0_i32_1 : i32, i32, i32
  }
  func.func @transform_15(%arg0: i32) -> (i32, i32, i32) {
    %c0_i32 = arith.constant 0 : i32
    %c0_i32_0 = arith.constant 0 : i32
    %c0_i32_1 = arith.constant 0 : i32
    %c0_i32_2 = arith.constant 0 : i32
    return %c0_i32, %c0_i32_0, %c0_i32_1 : i32, i32, i32
  }
  func.func @transform_16(%arg0: i32) -> (i32, i32) {
    %c0_i32 = arith.constant 0 : i32
    %c0_i32_0 = arith.constant 0 : i32
    %c0_i32_1 = arith.constant 0 : i32
    return %c0_i32, %c0_i32_0 : i32, i32
  }
  func.func @transform_17(%arg0: i32) -> (i32, i32) {
    %c0_i32 = arith.constant 0 : i32
    %c0_i32_0 = arith.constant 0 : i32
    %c0_i32_1 = arith.constant 0 : i32
    return %c0_i32, %c0_i32_0 : i32, i32
  }
  func.func @transform_18(%arg0: i32) -> (i32, i32, i32) {
    %c0_i32 = arith.constant 0 : i32
    %c0_i32_0 = arith.constant 0 : i32
    %c0_i32_1 = arith.constant 0 : i32
    return %arg0, %c0_i32, %c0_i32_0 : i32, i32, i32
  }
}

</mosaic_0001>

<llo_original>
// kernel: forward.1
$region0: #{forward.1}
  #allocation0 [shape = 'u32[]', space=smem, size = 0x4, offset = 0x4, fixed_abs, tag = 'smem constant byte address 0x4 - core index']
  #allocation1 [shape = 'u32[144,128]{1,0:T(1,128)}', space=vmem, size = 0x12000, scoped, tag = 'internal scratch']
  %s0 = inlined_call_operand.vmem [shape: f32[2,8,32], index: 0, kind: input, shape index: {}]
  %s1 = inlined_call_operand.vmem [shape: f32[2,1,8], index: 1, kind: input, shape index: {}]
  %s2 = inlined_call_operand.vmem [shape: f32[1,32], index: 2, kind: input, shape index: {}]
  %s3 = inlined_call_operand.vmem [shape: f32[1,32], index: 3, kind: input, shape index: {}]
  %s4 = inlined_call_operand.vmem [shape: f32[2,32,96], index: 4, kind: input, shape index: {}]
  %s5 = inlined_call_operand.vmem [shape: f32[2,1,96], index: 5, kind: input, shape index: {}]
  %s6 = inlined_call_operand.vmem [shape: f32[2,32,32], index: 6, kind: input, shape index: {}]
  %s7 = inlined_call_operand.vmem [shape: f32[2,1,32], index: 7, kind: input, shape index: {}]
  %s8 = inlined_call_operand.vmem [shape: f32[2,1,32], index: 8, kind: input, shape index: {}]
  %s9 = inlined_call_operand.vmem [shape: f32[2,1,32], index: 9, kind: input, shape index: {}]
  %s10 = inlined_call_operand.vmem [shape: f32[2,32,64], index: 10, kind: input, shape index: {}]
  %s11 = inlined_call_operand.vmem [shape: f32[2,1,64], index: 11, kind: input, shape index: {}]
  %s12 = inlined_call_operand.vmem [shape: f32[2,64,32], index: 12, kind: input, shape index: {}]
  %s13 = inlined_call_operand.vmem [shape: f32[2,1,32], index: 13, kind: input, shape index: {}]
  %s14 = inlined_call_operand.vmem [shape: f32[2,1,32], index: 14, kind: input, shape index: {}]
  %s15 = inlined_call_operand.vmem [shape: f32[2,1,32], index: 15, kind: input, shape index: {}]
  %s16 = inlined_call_operand.vmem [shape: f32[32,128], index: 16, kind: input, shape index: {}]
  %s17 = inlined_call_operand.vmem [shape: f32[1,128], index: 17, kind: input, shape index: {}]
  %s18 = inlined_call_operand.hbm [shape: f32[2,1,128], index: 18, kind: output, shape index: {}]
  %s19 = sld [smem:[#allocation0]]
  $region105: #{forward.1} parent=0
    _
  %s21 = ssub.s32 1, %s19
  %s22 = scalar_select 0, %s21, %s19
  $region1: #{forward.1} parent=0
    #allocation2 [shape = 'u8[1024]{0}', space=vmem, size = 0x400, scoped, tag = 'output window, operand 0']
    #allocation3 [shape = 's32[2]{0}', space=sflag, size = 0x8, scoped, tag = 'scoped memory for forward.1']
    %23 = vsyncpa [#allocation3], 0
    %s24 = scalar_lea.sflag [#allocation3], 1
    %25 = vsyncpa %s24, 0
    loop: start=0, step=1, limit=4
    $region2: #{forward.1} parent=1 // loop_pre_header
      _
    $region3: #{forward.1} parent=1 // loop_header
      %s27 = sphi 0, %s31
      %p28 = scmp.ge.s32.totalorder %s27, 4
      %s37 = sphi 0, %s39
      %s40 = sphi 0, %s37
      %s41 = sphi 0, %s40
      %s57 = sphi 0, %s41
      %s63 = sphi 0, %s65
      %s66 = sphi 0, %s63
      %s67 = sphi 0, %s66
      %s83 = sphi 0, %s67
      %s87 = sphi 0, %s87
      %s89 = sphi 0, %s87
      %s90 = sphi 0, %s89
      %s104 = sphi 0, %s90
      %s108 = sphi 0, %s108
      %s110 = sphi 0, %s108
      %s111 = sphi 0, %s110
      %s125 = sphi 0, %s111
      %s129 = sphi 0, %s129
      %s131 = sphi 0, %s129
      %s132 = sphi 0, %s131
      %s146 = sphi 0, %s132
      %s150 = sphi 0, %s150
      %s152 = sphi 0, %s150
      %s153 = sphi 0, %s152
      %s167 = sphi 0, %s153
      %s171 = sphi 0, %s171
      %s173 = sphi 0, %s171
      %s174 = sphi 0, %s173
      %s188 = sphi 0, %s174
      %s192 = sphi 0, %s192
      %s194 = sphi 0, %s192
      %s195 = sphi 0, %s194
      %s209 = sphi 0, %s195
      %s213 = sphi 0, %s213
      %s215 = sphi 0, %s213
      %s216 = sphi 0, %s215
      %s230 = sphi 0, %s216
      %s234 = sphi 0, %s234
      %s236 = sphi 0, %s234
      %s237 = sphi 0, %s236
      %s251 = sphi 0, %s237
      %s255 = sphi 0, %s255
      %s257 = sphi 0, %s255
      %s258 = sphi 0, %s257
      %s272 = sphi 0, %s258
      %s276 = sphi 0, %s276
      %s278 = sphi 0, %s276
      %s279 = sphi 0, %s278
      %s293 = sphi 0, %s279
      %s297 = sphi 0, %s297
      %s299 = sphi 0, %s297
      %s300 = sphi 0, %s299
      %s314 = sphi 0, %s300
      %s318 = sphi 0, %s318
      %s320 = sphi 0, %s318
      %s321 = sphi 0, %s320
      %s335 = sphi 0, %s321
      %s339 = sphi 0, %s339
      %s341 = sphi 0, %s339
      %s342 = sphi 0, %s341
      %s356 = sphi 0, %s342
      %s360 = sphi 0, %s360
      %s362 = sphi 0, %s360
      %s363 = sphi 0, %s362
      %s377 = sphi 0, %s363
      %s381 = sphi 0, %s381
      %s383 = sphi 0, %s381
      %s384 = sphi 0, %s383
      %s398 = sphi 0, %s384
      %s402 = sphi 0, %s402
      %s404 = sphi 0, %s402
      %s405 = sphi 0, %s404
      %s419 = sphi 0, %s405
      %s425 = sphi 0, %s427
      %s428 = sphi 0, %s425
      %s429 = sphi 0, %s428
      %s445 = sphi 0, %s429
    $region4: #{forward.1} parent=1 // loop_header_branch
      %30 = sbr.rel (%p28) target = $region8
    $region5: #{forward.1} parent=1 // loop_body
      %s32 = ssub.s32 %s27, 1
      %s33 = ssub.s32 %s27, 2
      %s34 = sadd.s32 %s27, 1
      %s35 = ssub.s32 %s27, %s34
      %p36 = scmp.eq.s32.totalorder %s35, 0
      %s38 = sadd.s32 %s37, 1
      %s39 = scalar_select %p36, %s37, %s38
      %p42 = pneg %p36
      %p43 = scmp.eq.s32.totalorder %s27, 1
      %p44 = por %p42, %p43
      %p45 = scmp.ne.s32.totalorder %s37, %s40
      %p46 = scmp.eq.s32.totalorder %s27, 0
      %p47 = por %p45, %p46
      %p48 = scmp.ne.s32.totalorder %s37, %s40
      %p49 = scmp.eq.s32.totalorder %s32, 1
      %p50 = por %p48, %p49
      %p51 = scmp.ne.s32.totalorder %s40, %s41
      %p52 = scmp.eq.s32.totalorder %s32, 0
      %p53 = por %p51, %p52
      %p54 = scmp.ne.s32.totalorder %s40, %s41
      %p55 = scmp.eq.s32.totalorder %s33, 1
      %p56 = por %p54, %p55
      %p58 = scmp.ne.s32.totalorder %s41, %s57
      %p59 = scmp.eq.s32.totalorder %s33, 0
      %p60 = por %p58, %p59
      %s61 = ssub.s32 %s27, %s34
      %p62 = scmp.eq.s32.totalorder %s61, 0
      %s64 = sadd.s32 %s63, 1
      %s65 = scalar_select %p62, %s63, %s64
      %p68 = pneg %p62
      %p69 = scmp.eq.s32.totalorder %s27, 1
      %p70 = por %p68, %p69
      %p71 = scmp.ne.s32.totalorder %s63, %s66
      %p72 = scmp.eq.s32.totalorder %s27, 0
      %p73 = por %p71, %p72
      %p74 = scmp.ne.s32.totalorder %s63, %s66
      %p75 = scmp.eq.s32.totalorder %s32, 1
      %p76 = por %p74, %p75
      %p77 = scmp.ne.s32.totalorder %s66, %s67
      %p78 = scmp.eq.s32.totalorder %s32, 0
      %p79 = por %p77, %p78
      %p80 = scmp.ne.s32.totalorder %s66, %s67
      %p81 = scmp.eq.s32.totalorder %s33, 1
      %p82 = por %p80, %p81
      %p84 = scmp.ne.s32.totalorder %s67, %s83
      %p85 = scmp.eq.s32.totalorder %s33, 0
      %p86 = por %p84, %p85
      %s88 = sadd.s32 %s87, 1
      %p91 = scmp.eq.s32.totalorder %s27, 1
      %p92 = scmp.ne.s32.totalorder %s87, %s89
      %p93 = scmp.eq.s32.totalorder %s27, 0
      %p94 = por %p92, %p93
      %p95 = scmp.ne.s32.totalorder %s87, %s89
      %p96 = scmp.eq.s32.totalorder %s32, 1
      %p97 = por %p95, %p96
      %p98 = scmp.ne.s32.totalorder %s89, %s90
      %p99 = scmp.eq.s32.totalorder %s32, 0
      %p100 = por %p98, %p99
      %p101 = scmp.ne.s32.totalorder %s89, %s90
      %p102 = scmp.eq.s32.totalorder %s33, 1
      %p103 = por %p101, %p102
      %p105 = scmp.ne.s32.totalorder %s90, %s104
      %p106 = scmp.eq.s32.totalorder %s33, 0
      %p107 = por %p105, %p106
      %s109 = sadd.s32 %s108, 1
      %p112 = scmp.eq.s32.totalorder %s27, 1
      %p113 = scmp.ne.s32.totalorder %s108, %s110
      %p114 = scmp.eq.s32.totalorder %s27, 0
      %p115 = por %p113, %p114
      %p116 = scmp.ne.s32.totalorder %s108, %s110
      %p117 = scmp.eq.s32.totalorder %s32, 1
      %p118 = por %p116, %p117
      %p119 = scmp.ne.s32.totalorder %s110, %s111
      %p120 = scmp.eq.s32.totalorder %s32, 0
      %p121 = por %p119, %p120
      %p122 = scmp.ne.s32.totalorder %s110, %s111
      %p123 = scmp.eq.s32.totalorder %s33, 1
      %p124 = por %p122, %p123
      %p126 = scmp.ne.s32.totalorder %s111, %s125
      %p127 = scmp.eq.s32.totalorder %s33, 0
      %p128 = por %p126, %p127
      %s130 = sadd.s32 %s129, 1
      %p133 = scmp.eq.s32.totalorder %s27, 1
      %p134 = scmp.ne.s32.totalorder %s129, %s131
      %p135 = scmp.eq.s32.totalorder %s27, 0
      %p136 = por %p134, %p135
      %p137 = scmp.ne.s32.totalorder %s129, %s131
      %p138 = scmp.eq.s32.totalorder %s32, 1
      %p139 = por %p137, %p138
      %p140 = scmp.ne.s32.totalorder %s131, %s132
      %p141 = scmp.eq.s32.totalorder %s32, 0
      %p142 = por %p140, %p141
      %p143 = scmp.ne.s32.totalorder %s131, %s132
      %p144 = scmp.eq.s32.totalorder %s33, 1
      %p145 = por %p143, %p144
      %p147 = scmp.ne.s32.totalorder %s132, %s146
      %p148 = scmp.eq.s32.totalorder %s33, 0
      %p149 = por %p147, %p148
      %s151 = sadd.s32 %s150, 1
      %p154 = scmp.eq.s32.totalorder %s27, 1
      %p155 = scmp.ne.s32.totalorder %s150, %s152
      %p156 = scmp.eq.s32.totalorder %s27, 0
      %p157 = por %p155, %p156
      %p158 = scmp.ne.s32.totalorder %s150, %s152
      %p159 = scmp.eq.s32.totalorder %s32, 1
      %p160 = por %p158, %p159
      %p161 = scmp.ne.s32.totalorder %s152, %s153
      %p162 = scmp.eq.s32.totalorder %s32, 0
      %p163 = por %p161, %p162
      %p164 = scmp.ne.s32.totalorder %s152, %s153
      %p165 = scmp.eq.s32.totalorder %s33, 1
      %p166 = por %p164, %p165
      %p168 = scmp.ne.s32.totalorder %s153, %s167
      %p169 = scmp.eq.s32.totalorder %s33, 0
      %p170 = por %p168, %p169
      %s172 = sadd.s32 %s171, 1
      %p175 = scmp.eq.s32.totalorder %s27, 1
      %p176 = scmp.ne.s32.totalorder %s171, %s173
      %p177 = scmp.eq.s32.totalorder %s27, 0
      %p178 = por %p176, %p177
      %p179 = scmp.ne.s32.totalorder %s171, %s173
      %p180 = scmp.eq.s32.totalorder %s32, 1
      %p181 = por %p179, %p180
      %p182 = scmp.ne.s32.totalorder %s173, %s174
      %p183 = scmp.eq.s32.totalorder %s32, 0
      %p184 = por %p182, %p183
      %p185 = scmp.ne.s32.totalorder %s173, %s174
      %p186 = scmp.eq.s32.totalorder %s33, 1
      %p187 = por %p185, %p186
      %p189 = scmp.ne.s32.totalorder %s174, %s188
      %p190 = scmp.eq.s32.totalorder %s33, 0
      %p191 = por %p189, %p190
      %s193 = sadd.s32 %s192, 1
      %p196 = scmp.eq.s32.totalorder %s27, 1
      %p197 = scmp.ne.s32.totalorder %s192, %s194
      %p198 = scmp.eq.s32.totalorder %s27, 0
      %p199 = por %p197, %p198
      %p200 = scmp.ne.s32.totalorder %s192, %s194
      %p201 = scmp.eq.s32.totalorder %s32, 1
      %p202 = por %p200, %p201
      %p203 = scmp.ne.s32.totalorder %s194, %s195
      %p204 = scmp.eq.s32.totalorder %s32, 0
      %p205 = por %p203, %p204
      %p206 = scmp.ne.s32.totalorder %s194, %s195
      %p207 = scmp.eq.s32.totalorder %s33, 1
      %p208 = por %p206, %p207
      %p210 = scmp.ne.s32.totalorder %s195, %s209
      %p211 = scmp.eq.s32.totalorder %s33, 0
      %p212 = por %p210, %p211
      %s214 = sadd.s32 %s213, 1
      %p217 = scmp.eq.s32.totalorder %s27, 1
      %p218 = scmp.ne.s32.totalorder %s213, %s215
      %p219 = scmp.eq.s32.totalorder %s27, 0
      %p220 = por %p218, %p219
      %p221 = scmp.ne.s32.totalorder %s213, %s215
      %p222 = scmp.eq.s32.totalorder %s32, 1
      %p223 = por %p221, %p222
      %p224 = scmp.ne.s32.totalorder %s215, %s216
      %p225 = scmp.eq.s32.totalorder %s32, 0
      %p226 = por %p224, %p225
      %p227 = scmp.ne.s32.totalorder %s215, %s216
      %p228 = scmp.eq.s32.totalorder %s33, 1
      %p229 = por %p227, %p228
      %p231 = scmp.ne.s32.totalorder %s216, %s230
      %p232 = scmp.eq.s32.totalorder %s33, 0
      %p233 = por %p231, %p232
      %s235 = sadd.s32 %s234, 1
      %p238 = scmp.eq.s32.totalorder %s27, 1
      %p239 = scmp.ne.s32.totalorder %s234, %s236
      %p240 = scmp.eq.s32.totalorder %s27, 0
      %p241 = por %p239, %p240
      %p242 = scmp.ne.s32.totalorder %s234, %s236
      %p243 = scmp.eq.s32.totalorder %s32, 1
      %p244 = por %p242, %p243
      %p245 = scmp.ne.s32.totalorder %s236, %s237
      %p246 = scmp.eq.s32.totalorder %s32, 0
      %p247 = por %p245, %p246
      %p248 = scmp.ne.s32.totalorder %s236, %s237
      %p249 = scmp.eq.s32.totalorder %s33, 1
      %p250 = por %p248, %p249
      %p252 = scmp.ne.s32.totalorder %s237, %s251
      %p253 = scmp.eq.s32.totalorder %s33, 0
      %p254 = por %p252, %p253
      %s256 = sadd.s32 %s255, 1
      %p259 = scmp.eq.s32.totalorder %s27, 1
      %p260 = scmp.ne.s32.totalorder %s255, %s257
      %p261 = scmp.eq.s32.totalorder %s27, 0
      %p262 = por %p260, %p261
      %p263 = scmp.ne.s32.totalorder %s255, %s257
      %p264 = scmp.eq.s32.totalorder %s32, 1
      %p265 = por %p263, %p264
      %p266 = scmp.ne.s32.totalorder %s257, %s258
      %p267 = scmp.eq.s32.totalorder %s32, 0
      %p268 = por %p266, %p267
      %p269 = scmp.ne.s32.totalorder %s257, %s258
      %p270 = scmp.eq.s32.totalorder %s33, 1
      %p271 = por %p269, %p270
      %p273 = scmp.ne.s32.totalorder %s258, %s272
      %p274 = scmp.eq.s32.totalorder %s33, 0
      %p275 = por %p273, %p274
      %s277 = sadd.s32 %s276, 1
      %p280 = scmp.eq.s32.totalorder %s27, 1
      %p281 = scmp.ne.s32.totalorder %s276, %s278
      %p282 = scmp.eq.s32.totalorder %s27, 0
      %p283 = por %p281, %p282
      %p284 = scmp.ne.s32.totalorder %s276, %s278
      %p285 = scmp.eq.s32.totalorder %s32, 1
      %p286 = por %p284, %p285
      %p287 = scmp.ne.s32.totalorder %s278, %s279
      %p288 = scmp.eq.s32.totalorder %s32, 0
      %p289 = por %p287, %p288
      %p290 = scmp.ne.s32.totalorder %s278, %s279
      %p291 = scmp.eq.s32.totalorder %s33, 1
      %p292 = por %p290, %p291
      %p294 = scmp.ne.s32.totalorder %s279, %s293
      %p295 = scmp.eq.s32.totalorder %s33, 0
      %p296 = por %p294, %p295
      %s298 = sadd.s32 %s297, 1
      %p301 = scmp.eq.s32.totalorder %s27, 1
      %p302 = scmp.ne.s32.totalorder %s297, %s299
      %p303 = scmp.eq.s32.totalorder %s27, 0
      %p304 = por %p302, %p303
      %p305 = scmp.ne.s32.totalorder %s297, %s299
      %p306 = scmp.eq.s32.totalorder %s32, 1
      %p307 = por %p305, %p306
      %p308 = scmp.ne.s32.totalorder %s299, %s300
      %p309 = scmp.eq.s32.totalorder %s32, 0
      %p310 = por %p308, %p309
      %p311 = scmp.ne.s32.totalorder %s299, %s300
      %p312 = scmp.eq.s32.totalorder %s33, 1
      %p313 = por %p311, %p312
      %p315 = scmp.ne.s32.totalorder %s300, %s314
      %p316 = scmp.eq.s32.totalorder %s33, 0
      %p317 = por %p315, %p316
      %s319 = sadd.s32 %s318, 1
      %p322 = scmp.eq.s32.totalorder %s27, 1
      %p323 = scmp.ne.s32.totalorder %s318, %s320
      %p324 = scmp.eq.s32.totalorder %s27, 0
      %p325 = por %p323, %p324
      %p326 = scmp.ne.s32.totalorder %s318, %s320
      %p327 = scmp.eq.s32.totalorder %s32, 1
      %p328 = por %p326, %p327
      %p329 = scmp.ne.s32.totalorder %s320, %s321
      %p330 = scmp.eq.s32.totalorder %s32, 0
      %p331 = por %p329, %p330
      %p332 = scmp.ne.s32.totalorder %s320, %s321
      %p333 = scmp.eq.s32.totalorder %s33, 1
      %p334 = por %p332, %p333
      %p336 = scmp.ne.s32.totalorder %s321, %s335
      %p337 = scmp.eq.s32.totalorder %s33, 0
      %p338 = por %p336, %p337
      %s340 = sadd.s32 %s339, 1
      %p343 = scmp.eq.s32.totalorder %s27, 1
      %p344 = scmp.ne.s32.totalorder %s339, %s341
      %p345 = scmp.eq.s32.totalorder %s27, 0
      %p346 = por %p344, %p345
      %p347 = scmp.ne.s32.totalorder %s339, %s341
      %p348 = scmp.eq.s32.totalorder %s32, 1
      %p349 = por %p347, %p348
      %p350 = scmp.ne.s32.totalorder %s341, %s342
      %p351 = scmp.eq.s32.totalorder %s32, 0
      %p352 = por %p350, %p351
      %p353 = scmp.ne.s32.totalorder %s341, %s342
      %p354 = scmp.eq.s32.totalorder %s33, 1
      %p355 = por %p353, %p354
      %p357 = scmp.ne.s32.totalorder %s342, %s356
      %p358 = scmp.eq.s32.totalorder %s33, 0
      %p359 = por %p357, %p358
      %s361 = sadd.s32 %s360, 1
      %p364 = scmp.eq.s32.totalorder %s27, 1
      %p365 = scmp.ne.s32.totalorder %s360, %s362
      %p366 = scmp.eq.s32.totalorder %s27, 0
      %p367 = por %p365, %p366
      %p368 = scmp.ne.s32.totalorder %s360, %s362
      %p369 = scmp.eq.s32.totalorder %s32, 1
      %p370 = por %p368, %p369
      %p371 = scmp.ne.s32.totalorder %s362, %s363
      %p372 = scmp.eq.s32.totalorder %s32, 0
      %p373 = por %p371, %p372
      %p374 = scmp.ne.s32.totalorder %s362, %s363
      %p375 = scmp.eq.s32.totalorder %s33, 1
      %p376 = por %p374, %p375
      %p378 = scmp.ne.s32.totalorder %s363, %s377
      %p379 = scmp.eq.s32.totalorder %s33, 0
      %p380 = por %p378, %p379
      %s382 = sadd.s32 %s381, 1
      %p385 = scmp.eq.s32.totalorder %s27, 1
      %p386 = scmp.ne.s32.totalorder %s381, %s383
      %p387 = scmp.eq.s32.totalorder %s27, 0
      %p388 = por %p386, %p387
      %p389 = scmp.ne.s32.totalorder %s381, %s383
      %p390 = scmp.eq.s32.totalorder %s32, 1
      %p391 = por %p389, %p390
      %p392 = scmp.ne.s32.totalorder %s383, %s384
      %p393 = scmp.eq.s32.totalorder %s32, 0
      %p394 = por %p392, %p393
      %p395 = scmp.ne.s32.totalorder %s383, %s384
      %p396 = scmp.eq.s32.totalorder %s33, 1
      %p397 = por %p395, %p396
      %p399 = scmp.ne.s32.totalorder %s384, %s398
      %p400 = scmp.eq.s32.totalorder %s33, 0
      %p401 = por %p399, %p400
      %s403 = sadd.s32 %s402, 1
      %p406 = scmp.eq.s32.totalorder %s27, 1
      %p407 = scmp.ne.s32.totalorder %s402, %s404
      %p408 = scmp.eq.s32.totalorder %s27, 0
      %p409 = por %p407, %p408
      %p410 = scmp.ne.s32.totalorder %s402, %s404
      %p411 = scmp.eq.s32.totalorder %s32, 1
      %p412 = por %p410, %p411
      %p413 = scmp.ne.s32.totalorder %s404, %s405
      %p414 = scmp.eq.s32.totalorder %s32, 0
      %p415 = por %p413, %p414
      %p416 = scmp.ne.s32.totalorder %s404, %s405
      %p417 = scmp.eq.s32.totalorder %s33, 1
      %p418 = por %p416, %p417
      %p420 = scmp.ne.s32.totalorder %s405, %s419
      %p421 = scmp.eq.s32.totalorder %s33, 0
      %p422 = por %p420, %p421
      %s423 = ssub.s32 %s27, %s34
      %p424 = scmp.eq.s32.totalorder %s423, 0
      %s426 = sadd.s32 %s425, 1
      %s427 = scalar_select %p424, %s425, %s426
      %p430 = pneg %p424
      %p431 = scmp.eq.s32.totalorder %s27, 1
      %p432 = por %p430, %p431
      %p433 = scmp.ne.s32.totalorder %s425, %s428
      %p434 = scmp.eq.s32.totalorder %s27, 0
      %p435 = por %p433, %p434
      %p436 = scmp.ne.s32.totalorder %s425, %s428
      %p437 = scmp.eq.s32.totalorder %s32, 1
      %p438 = por %p436, %p437
      %p439 = scmp.ne.s32.totalorder %s428, %s429
      %p440 = scmp.eq.s32.totalorder %s32, 0
      %p441 = por %p439, %p440
      %p442 = scmp.ne.s32.totalorder %s428, %s429
      %p443 = scmp.eq.s32.totalorder %s33, 1
      %p444 = por %p442, %p443
      %p446 = scmp.ne.s32.totalorder %s429, %s445
      %p447 = scmp.eq.s32.totalorder %s33, 0
      %p448 = por %p446, %p447
      %p449 = scmp.le.s32.totalorder 1, %s27
      %p450 = scmp.lt.s32.totalorder %s27, 3
      %p451 = pnand %p449, %p450
      %p452 = pneg %p451
      // Predicated region
      $region9: #{forward.1} parent=5 // pred_check
        _
      $region10: #{forward.1} parent=5 // pred_check_branch
        %454 = sbr.rel (%p451) target = $region12
      $region11: #{forward.1} parent=5 // pred_region
        %s455 = ssub.s32 %s27, 1
        // Predicated region
        $region13: #{forward.1} parent=11 // pred_check
          %p456 = pneg %p100
        $region14: #{forward.1} parent=11 // pred_check_branch
          %458 = sbr.rel (%p456) target = $region16
        $region15: #{forward.1} parent=11 // pred_region
          _
        $region16: #{forward.1} parent=11 // pred_fallthru
          _
        // Predicated region
        $region17: #{forward.1} parent=11 // pred_check
          %p459 = pneg %p121
        $region18: #{forward.1} parent=11 // pred_check_branch
          %461 = sbr.rel (%p459) target = $region20
        $region19: #{forward.1} parent=11 // pred_region
          _
        $region20: #{forward.1} parent=11 // pred_fallthru
          _
        // Predicated region
        $region21: #{forward.1} parent=11 // pred_check
          %p462 = pneg %p142
        $region22: #{forward.1} parent=11 // pred_check_branch
          %464 = sbr.rel (%p462) target = $region24
        $region23: #{forward.1} parent=11 // pred_region
          _
        $region24: #{forward.1} parent=11 // pred_fallthru
          _
        // Predicated region
        $region25: #{forward.1} parent=11 // pred_check
          %p465 = pneg %p163
        $region26: #{forward.1} parent=11 // pred_check_branch
          %467 = sbr.rel (%p465) target = $region28
        $region27: #{forward.1} parent=11 // pred_region
          _
        $region28: #{forward.1} parent=11 // pred_fallthru
          _
        // Predicated region
        $region29: #{forward.1} parent=11 // pred_check
          %p468 = pneg %p184
        $region30: #{forward.1} parent=11 // pred_check_branch
          %470 = sbr.rel (%p468) target = $region32
        $region31: #{forward.1} parent=11 // pred_region
          _
        $region32: #{forward.1} parent=11 // pred_fallthru
          _
        // Predicated region
        $region33: #{forward.1} parent=11 // pred_check
          %p471 = pneg %p205
        $region34: #{forward.1} parent=11 // pred_check_branch
          %473 = sbr.rel (%p471) target = $region36
        $region35: #{forward.1} parent=11 // pred_region
          _
        $region36: #{forward.1} parent=11 // pred_fallthru
          _
        // Predicated region
        $region37: #{forward.1} parent=11 // pred_check
          %p474 = pneg %p226
        $region38: #{forward.1} parent=11 // pred_check_branch
          %476 = sbr.rel (%p474) target = $region40
        $region39: #{forward.1} parent=11 // pred_region
          _
        $region40: #{forward.1} parent=11 // pred_fallthru
          _
        // Predicated region
        $region41: #{forward.1} parent=11 // pred_check
          %p477 = pneg %p247
        $region42: #{forward.1} parent=11 // pred_check_branch
          %479 = sbr.rel (%p477) target = $region44
        $region43: #{forward.1} parent=11 // pred_region
          _
        $region44: #{forward.1} parent=11 // pred_fallthru
          _
        // Predicated region
        $region45: #{forward.1} parent=11 // pred_check
          %p480 = pneg %p268
        $region46: #{forward.1} parent=11 // pred_check_branch
          %482 = sbr.rel (%p480) target = $region48
        $region47: #{forward.1} parent=11 // pred_region
          _
        $region48: #{forward.1} parent=11 // pred_fallthru
          _
        // Predicated region
        $region49: #{forward.1} parent=11 // pred_check
          %p483 = pneg %p289
        $region50: #{forward.1} parent=11 // pred_check_branch
          %485 = sbr.rel (%p483) target = $region52
        $region51: #{forward.1} parent=11 // pred_region
          _
        $region52: #{forward.1} parent=11 // pred_fallthru
          _
        // Predicated region
        $region53: #{forward.1} parent=11 // pred_check
          %p486 = pneg %p310
        $region54: #{forward.1} parent=11 // pred_check_branch
          %488 = sbr.rel (%p486) target = $region56
        $region55: #{forward.1} parent=11 // pred_region
          _
        $region56: #{forward.1} parent=11 // pred_fallthru
          _
        // Predicated region
        $region57: #{forward.1} parent=11 // pred_check
          %p489 = pneg %p331
        $region58: #{forward.1} parent=11 // pred_check_branch
          %491 = sbr.rel (%p489) target = $region60
        $region59: #{forward.1} parent=11 // pred_region
          _
        $region60: #{forward.1} parent=11 // pred_fallthru
          _
        // Predicated region
        $region61: #{forward.1} parent=11 // pred_check
          %p492 = pneg %p352
        $region62: #{forward.1} parent=11 // pred_check_branch
          %494 = sbr.rel (%p492) target = $region64
        $region63: #{forward.1} parent=11 // pred_region
          _
        $region64: #{forward.1} parent=11 // pred_fallthru
          _
        // Predicated region
        $region65: #{forward.1} parent=11 // pred_check
          %p495 = pneg %p373
        $region66: #{forward.1} parent=11 // pred_check_branch
          %497 = sbr.rel (%p495) target = $region68
        $region67: #{forward.1} parent=11 // pred_region
          _
        $region68: #{forward.1} parent=11 // pred_fallthru
          _
        // Predicated region
        $region69: #{forward.1} parent=11 // pred_check
          %p498 = pneg %p394
        $region70: #{forward.1} parent=11 // pred_check_branch
          %500 = sbr.rel (%p498) target = $region72
        $region71: #{forward.1} parent=11 // pred_region
          _
        $region72: #{forward.1} parent=11 // pred_fallthru
          _
        // Predicated region
        $region73: #{forward.1} parent=11 // pred_check
          %p501 = pneg %p415
        $region74: #{forward.1} parent=11 // pred_check_branch
          %503 = sbr.rel (%p501) target = $region76
        $region75: #{forward.1} parent=11 // pred_region
          _
        $region76: #{forward.1} parent=11 // pred_fallthru
          _
      $region12: #{forward.1} parent=5 // pred_fallthru
        _
      %p504 = scmp.lt.s32.totalorder %s27, 2
      // Predicated region
      $region77: #{forward.1} parent=5 // pred_check
        %p505 = pneg %p504
      $region78: #{forward.1} parent=5 // pred_check_branch
        %507 = sbr.rel (%p505) target = $region80
      $region79: #{forward.1} parent=5 // pred_region
        // Predicated region
        $region81: #{forward.1} parent=79 // pred_check
          %p508 = pneg %p47
        $region82: #{forward.1} parent=79 // pred_check_branch
          %510 = sbr.rel (%p508) target = $region84
        $region83: #{forward.1} parent=79 // pred_region
          %p511 = scmp.lt.s32.totalorder %s27, 1
          %s512 = scalar_select %p511, %s27, 1
          %s513 = smul.addr %s512, 8
          %s514 = scalar_lea.vmem %s0, %s513
        $region84: #{forward.1} parent=79 // pred_fallthru
          _
        // Predicated region
        $region85: #{forward.1} parent=79 // pred_check
          %p515 = pneg %p73
        $region86: #{forward.1} parent=79 // pred_check_branch
          %517 = sbr.rel (%p515) target = $region88
        $region87: #{forward.1} parent=79 // pred_region
          %p518 = scmp.lt.s32.totalorder %s27, 1
          %s519 = scalar_select %p518, %s27, 1
          %s520 = scalar_lea.vmem %s1, %s519
        $region88: #{forward.1} parent=79 // pred_fallthru
          _
      $region80: #{forward.1} parent=5 // pred_fallthru
        _
      %p521 = scmp.le.s32.totalorder 1, %s27
      %p522 = scmp.lt.s32.totalorder %s27, 3
      %p523 = pnand %p521, %p522
      %p524 = pneg %p523
      // Predicated region
      $region89: #{forward.1} parent=5 // pred_check
        _
      $region90: #{forward.1} parent=5 // pred_check_branch
        %526 = sbr.rel (%p523) target = $region92
      $region91: #{forward.1} parent=5 // pred_region
        %s527 = ssub.s32 %s27, 1
        %p528 = scmp.lt.s32.totalorder %s32, 1
        %s529 = scalar_select %p528, %s32, 1
        %s530 = smul.addr %s529, 8
        %s531 = scalar_lea.vmem %s0, %s530
        %p532 = pneg %p53
        %p533 = pneg %p50
        %p534 = scmp.lt.s32.totalorder %s32, 1
        %s535 = scalar_select %p534, %s32, 1
        %s536 = scalar_lea.vmem %s1, %s535
        %p537 = pneg %p79
        %p538 = pneg %p76
        %p539 = pneg %p100
        %p540 = pneg %p97
        %p541 = pneg %p121
        %p542 = pneg %p118
        %p543 = pneg %p142
        %p544 = pneg %p139
        %p545 = pneg %p163
        %p546 = pneg %p160
        %p547 = pneg %p184
        %p548 = pneg %p181
        %p549 = pneg %p205
        %p550 = pneg %p202
        %p551 = pneg %p226
        %p552 = pneg %p223
        %p553 = pneg %p247
        %p554 = pneg %p244
        %p555 = pneg %p268
        %p556 = pneg %p265
        %p557 = pneg %p289
        %p558 = pneg %p286
        %p559 = pneg %p310
        %p560 = pneg %p307
        %p561 = pneg %p331
        %p562 = pneg %p328
        %p563 = pneg %p352
        %p564 = pneg %p349
        %p565 = pneg %p373
        %p566 = pneg %p370
        %p567 = pneg %p394
        %p568 = pneg %p391
        %p569 = pneg %p415
        %p570 = pneg %p412
        %p571 = pneg %p441
        %p572 = pneg %p438
        %s573 = sand.u32 %s428, 1
        %s574 = scalar_lea.sflag [#allocation3], %s573
        %s575 = sand.u32 %s428, 1
        %s576 = scalar_lea.vmem [#allocation2], %s575
        %p577 = scmp.lt.s32.totalorder %s32, 1
        %s578 = scalar_select %p577, %s32, 1
        %s579 = smul.addr %s578, 8
        %s580 = scalar_lea.vmem %s0, %s579
        %p581 = scmp.lt.s32.totalorder %s32, 1
        %s582 = scalar_select %p581, %s32, 1
        %s583 = scalar_lea.vmem %s1, %s582
        %v585 = vld [vmem:[%s580] sm:$0xff]
        %v586 = vld [vmem:[%s2] sm:$0x1]
        %v587 = vld [vmem:[%s3] sm:$0x1]
        %vm588 = vcmask 261120
        %v589 = vsel %vm588, %v585, 0.0
        %590 = vadd.xlane.f32.xlu0 %v589
        %v591 = vpop.xlane.xlu0 %590
        %v592 = vrcp.pop 32.0
        %v593 = vmul.f32 %v591, %v592
        %v594 = vsub.f32 %v585, %v593
        %v595 = vmul.f32 %v594, %v594
        %v596 = vsel %vm588, %v595, 0.0
        %597 = vadd.xlane.f32.xlu0 %v596
        %v598 = vpop.xlane.xlu0 %597
        %v599 = vmul.f32 %v598, %v592
        %v600 = vadd.f32 %v599, 1e-12
        %v601 = vrsqrt.pop %v600
        %v602 = vmul.f32 %v594, %v601
        %v604 = vlaneseq
        %v605 = vshrl.u32 %v604, 7
        %v606 = vsub.s32 0, %v605
        %v607 = vrot.slane %v586, %v606
        %v609 = vmul.f32 %v602, %v607
        %v611 = vlaneseq
        %v612 = vshrl.u32 %v611, 7
        %v613 = vsub.s32 0, %v612
        %v614 = vrot.slane %v587, %v613
        %v616 = vadd.f32 %v609, %v614
        %v617 = vld [vmem:[%s583] sm:$0x1]
        %v618 = vpack.c.bf16 %v616, %v616
        %v619 = vld [vmem:[%s4] sm:$0xff]
        %v620 = vld [vmem:[%s4 + $0x8] sm:$0xff]
        %v621 = vld [vmem:[%s4 + $0x10] sm:$0xff]
        %v622 = vld [vmem:[%s4 + $0x18] sm:$0xff]
        %v623 = vpack.c.bf16 %v620, %v619
        %v624 = vpack.c.bf16 %v622, %v621
        %v625 = vld [vmem:[%s5] sm:$0x1]
        %v627 = vlaneseq
        %v628 = vshrl.u32 %v627, 7
        %v629 = vsub.s32 0, %v628
        %v630 = vrot.slane %v625, %v629
        %v633 = vsel %vm588, %v618, 0
        %635 = vmatprep.subr.bf16.mxu0 0
        %636 = vmatpush1.bf16.msra.mxu0 %v623
        %637 = vmatprep.subr.bf16.mxu0 0
        %638 = vmatpush1.bf16.msra.mxu0 %v624
        %639 = vmatprep.subr.bf16.mxu0 0
        %640 = vmatpush1.bf16.msra.mxu0 0
        %641 = vmatprep.subr.bf16.mxu0 0
        %642 = vmatpush1.bf16.msra.mxu0 0
        %643 = vmatprep.subr.bf16.mxu0 0
        %644 = vmatpush1.bf16.msra.mxu0 0
        %645 = vmatprep.subr.bf16.mxu0 0
        %646 = vmatpush1.bf16.msra.mxu0 0
        %647 = vmatprep.subr.bf16.mxu0 0
        %648 = vmatpush1.bf16.msra.mxu0 0
        %649 = vmatprep.subr.bf16.mxu0 0
        %650 = vmatpush1.bf16.msra.mxu0 0
        %651 = vmatprep.subr.bf16.mxu0 0
        %652 = vmatpush1.bf16.msra.mxu0 0
        %653 = vmatprep.subr.bf16.mxu0 0
        %654 = vmatpush1.bf16.msra.mxu0 0
        %655 = vmatprep.subr.bf16.mxu0 0
        %656 = vmatpush1.bf16.msra.mxu0 0
        %657 = vmatprep.subr.bf16.mxu0 0
        %658 = vmatpush1.bf16.msra.mxu0 0
        %659 = vmatprep.subr.bf16.mxu0 0
        %660 = vmatpush1.bf16.msra.mxu0 0
        %661 = vmatprep.subr.bf16.mxu0 0
        %662 = vmatpush1.bf16.msra.mxu0 0
        %663 = vmatprep.subr.bf16.mxu0 0
        %664 = vmatpush1.bf16.msra.mxu0 0
        %665 = vmatprep.subr.bf16.mxu0 0
        %666 = vmatpush1.bf16.msra.mxu0 0
        %667 = vmatprep.mubr.bf16.mxu0 0
        %668 = vmatmul.mubr.bf16.gmra.mrb[0].mxu0 %v633
        %v669 = vpop.f32.mrb[0].mxu0
        %v670 = vadd.f32 %v630, %v669
        %v671 = vpop.f32.mrb[0].mxu0
        %v672 = vpop.f32.mrb[0].mxu0
        %v673 = vpop.f32.mrb[0].mxu0
        %674 = vdwg.mxu0
        %v675 = vld [vmem:[%s6] sm:$0xff]
        %v676 = vld [vmem:[%s6 + $0x8] sm:$0xff]
        %v677 = vld [vmem:[%s6 + $0x10] sm:$0xff]
        %v678 = vld [vmem:[%s6 + $0x18] sm:$0xff]
        %v679 = vld [vmem:[%s7] sm:$0x1]
        %v680 = vpack.c.bf16 %v670, %v670
        %682 = vrot.lane.b32.xlu0 %v680, 96
        %v683 = vpop.permute.xlu0 %682
        %vm684 = vcmask 130048
        %v686 = vsel %vm684, %v680, 0
        %v689 = vsel %vm684, %v683, 0
        %691 = vmatprep.subr.bf16.mxu0 0
        %692 = vmatpush1.bf16.xpose.msra.mxu0 %v689
        %693 = vmatprep.subr.bf16.mxu0 0
        %694 = vmatpush1.bf16.xpose.msra.mxu0 0
        %695 = vmatprep.subr.bf16.mxu0 0
        %696 = vmatpush1.bf16.xpose.msra.mxu0 0
        %697 = vmatprep.subr.bf16.mxu0 0
        %698 = vmatpush1.bf16.xpose.msra.mxu0 0
        %699 = vmatprep.subr.bf16.mxu0 0
        %700 = vmatpush1.bf16.xpose.msra.mxu0 0
        %701 = vmatprep.subr.bf16.mxu0 0
        %702 = vmatpush1.bf16.xpose.msra.mxu0 0
        %703 = vmatprep.subr.bf16.mxu0 0
        %704 = vmatpush1.bf16.xpose.msra.mxu0 0
        %705 = vmatprep.subr.bf16.mxu0 0
        %706 = vmatpush1.bf16.xpose.msra.mxu0 0
        %707 = vmatprep.subr.bf16.mxu0 0
        %708 = vmatpush1.bf16.xpose.msra.mxu0 0
        %709 = vmatprep.subr.bf16.mxu0 0
        %710 = vmatpush1.bf16.xpose.msra.mxu0 0
        %711 = vmatprep.subr.bf16.mxu0 0
        %712 = vmatpush1.bf16.xpose.msra.mxu0 0
        %713 = vmatprep.subr.bf16.mxu0 0
        %714 = vmatpush1.bf16.xpose.msra.mxu0 0
        %715 = vmatprep.subr.bf16.mxu0 0
        %716 = vmatpush1.bf16.xpose.msra.mxu0 0
        %717 = vmatprep.subr.bf16.mxu0 0
        %718 = vmatpush1.bf16.xpose.msra.mxu0 0
        %719 = vmatprep.subr.bf16.mxu0 0
        %720 = vmatpush1.bf16.xpose.msra.mxu0 0
        %721 = vmatprep.subr.bf16.mxu0 0
        %722 = vmatpush1.bf16.xpose.msra.mxu0 0
        %723 = vmatprep.mubr.bf16.mxu0 0
        %724 = vmatmul.mubr.bf16.gmra.mrb[0].mxu0 %v686
        %v725 = vpop.f32.mrb[0].mxu0
        %v726 = vadd.f32 0.0, %v725
        %v727 = vpop.f32.mrb[0].mxu0
        %v728 = vpop.f32.mrb[0].mxu0
        %v729 = vpop.f32.mrb[0].mxu0
        %730 = vdwg.mxu0
        %v731 = vmul.f32 %v726, 0.25
        %v733 = vlaneseq
        %v734 = vshrl.u32 %v733, 7
        %v735 = vsub.s32 0, %v734
        %v736 = vrot.slane %v617, %v735
        %v738 = vadd.f32 %v731, %v736
        %vm739 = vcmask 64512
        %v740 = vsel %vm739, %v738, -inf
        %741 = vmax.xlane.f32.xlu0 %v740
        %v742 = vpop.xlane.xlu0 %741
        %v743 = vsub.f32 %v738, %v742
        %v744 = vmul.f32 %v743, 1.442695
        %v745 = vpow.pop %v744
        %v746 = vsel %vm739, %v745, 0.0
        %747 = vadd.xlane.f32.xlu0 %v746
        %v748 = vpop.xlane.xlu0 %747
        %v749 = vrcp.pop %v748
        %v750 = vmul.f32 %v745, %v749
        %v751 = vpack.c.bf16 %v750, %v750
        %752 = vrot.lane.b32.xlu0 %v680, 64
        %v753 = vpop.permute.xlu0 %752
        %v755 = vsel %vm739, %v751, 0
        %vm757 = vcmask 1043456
        %v759 = vsel %vm757, %v753, 0
        %761 = vmatprep.subr.bf16.mxu0 0
        %762 = vmatpush1.bf16.msra.mxu0 %v759
        %763 = vmatprep.subr.bf16.mxu0 0
        %764 = vmatpush1.bf16.msra.mxu0 0
        %765 = vmatprep.subr.bf16.mxu0 0
        %766 = vmatpush1.bf16.msra.mxu0 0
        %767 = vmatprep.subr.bf16.mxu0 0
        %768 = vmatpush1.bf16.msra.mxu0 0
        %769 = vmatprep.subr.bf16.mxu0 0
        %770 = vmatpush1.bf16.msra.mxu0 0
        %771 = vmatprep.subr.bf16.mxu0 0
        %772 = vmatpush1.bf16.msra.mxu0 0
        %773 = vmatprep.subr.bf16.mxu0 0
        %774 = vmatpush1.bf16.msra.mxu0 0
        %775 = vmatprep.subr.bf16.mxu0 0
        %776 = vmatpush1.bf16.msra.mxu0 0
        %777 = vmatprep.subr.bf16.mxu0 0
        %778 = vmatpush1.bf16.msra.mxu0 0
        %779 = vmatprep.subr.bf16.mxu0 0
        %780 = vmatpush1.bf16.msra.mxu0 0
        %781 = vmatprep.subr.bf16.mxu0 0
        %782 = vmatpush1.bf16.msra.mxu0 0
        %783 = vmatprep.subr.bf16.mxu0 0
        %784 = vmatpush1.bf16.msra.mxu0 0
        %785 = vmatprep.subr.bf16.mxu0 0
        %786 = vmatpush1.bf16.msra.mxu0 0
        %787 = vmatprep.subr.bf16.mxu0 0
        %788 = vmatpush1.bf16.msra.mxu0 0
        %789 = vmatprep.subr.bf16.mxu0 0
        %790 = vmatpush1.bf16.msra.mxu0 0
        %791 = vmatprep.subr.bf16.mxu0 0
        %792 = vmatpush1.bf16.msra.mxu0 0
        %793 = vmatprep.mubr.bf16.mxu0 0
        %794 = vmatmul.mubr.bf16.gmra.mrb[0].mxu0 %v755
        %v795 = vpop.f32.mrb[0].mxu0
        %v796 = vadd.f32 0.0, %v795
        %v797 = vpop.f32.mrb[0].mxu0
        %v798 = vpop.f32.mrb[0].mxu0
        %v799 = vpop.f32.mrb[0].mxu0
        %800 = vdwg.mxu0
        %v801 = vpack.c.bf16 %v796, %v796
        %v802 = vpack.c.bf16 %v676, %v675
        %v804 = vsel %vm684, %v801, 0
        %806 = vmatprep.subr.bf16.mxu0 0
        %807 = vmatpush1.bf16.msra.mxu0 %v802
        %808 = vmatprep.subr.bf16.mxu0 0
        %809 = vmatpush1.bf16.msra.mxu0 0
        %810 = vmatprep.subr.bf16.mxu0 0
        %811 = vmatpush1.bf16.msra.mxu0 0
        %812 = vmatprep.subr.bf16.mxu0 0
        %813 = vmatpush1.bf16.msra.mxu0 0
        %814 = vmatprep.subr.bf16.mxu0 0
        %815 = vmatpush1.bf16.msra.mxu0 0
        %816 = vmatprep.subr.bf16.mxu0 0
        %817 = vmatpush1.bf16.msra.mxu0 0
        %818 = vmatprep.subr.bf16.mxu0 0
        %819 = vmatpush1.bf16.msra.mxu0 0
        %820 = vmatprep.subr.bf16.mxu0 0
        %821 = vmatpush1.bf16.msra.mxu0 0
        %822 = vmatprep.subr.bf16.mxu0 0
        %823 = vmatpush1.bf16.msra.mxu0 0
        %824 = vmatprep.subr.bf16.mxu0 0
        %825 = vmatpush1.bf16.msra.mxu0 0
        %826 = vmatprep.subr.bf16.mxu0 0
        %827 = vmatpush1.bf16.msra.mxu0 0
        %828 = vmatprep.subr.bf16.mxu0 0
        %829 = vmatpush1.bf16.msra.mxu0 0
        %830 = vmatprep.subr.bf16.mxu0 0
        %831 = vmatpush1.bf16.msra.mxu0 0
        %832 = vmatprep.subr.bf16.mxu0 0
        %833 = vmatpush1.bf16.msra.mxu0 0
        %834 = vmatprep.subr.bf16.mxu0 0
        %835 = vmatpush1.bf16.msra.mxu0 0
        %836 = vmatprep.subr.bf16.mxu0 0
        %837 = vmatpush1.bf16.msra.mxu0 0
        %838 = vmatprep.mubr.bf16.mxu0 0
        %839 = vmatmul.mubr.bf16.gmra.mrb[0].mxu0 %v804
        %v840 = vpop.f32.mrb[0].mxu0
        %v841 = vadd.f32 0.0, %v840
        %v842 = vpop.f32.mrb[0].mxu0
        %v843 = vpop.f32.mrb[0].mxu0
        %v844 = vpop.f32.mrb[0].mxu0
        %845 = vdwg.mxu0
        %v847 = vlaneseq
        %v848 = vshrl.u32 %v847, 7
        %v849 = vsub.s32 0, %v848
        %v850 = vrot.slane %v679, %v849
        %v852 = vadd.f32 %v850, %v841
        %853 = vrot.lane.b32.xlu0 %v680, 112
        %v854 = vpop.permute.xlu0 %853
        %855 = vrot.lane.b32.xlu0 %v680, 80
        %v856 = vpop.permute.xlu0 %855
        %v858 = vsel %vm684, %v854, 0
        %v861 = vsel %vm684, %v856, 0
        %863 = vmatprep.subr.bf16.mxu0 0
        %864 = vmatpush1.bf16.xpose.msra.mxu0 %v861
        %865 = vmatprep.subr.bf16.mxu0 0
        %866 = vmatpush1.bf16.xpose.msra.mxu0 0
        %867 = vmatprep.subr.bf16.mxu0 0
        %868 = vmatpush1.bf16.xpose.msra.mxu0 0
        %869 = vmatprep.subr.bf16.mxu0 0
        %870 = vmatpush1.bf16.xpose.msra.mxu0 0
        %871 = vmatprep.subr.bf16.mxu0 0
        %872 = vmatpush1.bf16.xpose.msra.mxu0 0
        %873 = vmatprep.subr.bf16.mxu0 0
        %874 = vmatpush1.bf16.xpose.msra.mxu0 0
        %875 = vmatprep.subr.bf16.mxu0 0
        %876 = vmatpush1.bf16.xpose.msra.mxu0 0
        %877 = vmatprep.subr.bf16.mxu0 0
        %878 = vmatpush1.bf16.xpose.msra.mxu0 0
        %879 = vmatprep.subr.bf16.mxu0 0
        %880 = vmatpush1.bf16.xpose.msra.mxu0 0
        %881 = vmatprep.subr.bf16.mxu0 0
        %882 = vmatpush1.bf16.xpose.msra.mxu0 0
        %883 = vmatprep.subr.bf16.mxu0 0
        %884 = vmatpush1.bf16.xpose.msra.mxu0 0
        %885 = vmatprep.subr.bf16.mxu0 0
        %886 = vmatpush1.bf16.xpose.msra.mxu0 0
        %887 = vmatprep.subr.bf16.mxu0 0
        %888 = vmatpush1.bf16.xpose.msra.mxu0 0
        %889 = vmatprep.subr.bf16.mxu0 0
        %890 = vmatpush1.bf16.xpose.msra.mxu0 0
        %891 = vmatprep.subr.bf16.mxu0 0
        %892 = vmatpush1.bf16.xpose.msra.mxu0 0
        %893 = vmatprep.subr.bf16.mxu0 0
        %894 = vmatpush1.bf16.xpose.msra.mxu0 0
        %895 = vmatprep.mubr.bf16.mxu0 0
        %896 = vmatmul.mubr.bf16.gmra.mrb[0].mxu0 %v858
        %v897 = vpop.f32.mrb[0].mxu0
        %v898 = vadd.f32 0.0, %v897
        %v899 = vpop.f32.mrb[0].mxu0
        %v900 = vpop.f32.mrb[0].mxu0
        %v901 = vpop.f32.mrb[0].mxu0
        %902 = vdwg.mxu0
        %v903 = vmul.f32 %v898, 0.25
        %v904 = vadd.f32 %v903, %v736
        %v905 = vsel %vm739, %v904, -inf
        %906 = vmax.xlane.f32.xlu0 %v905
        %v907 = vpop.xlane.xlu0 %906
        %v908 = vsub.f32 %v904, %v907
        %v909 = vmul.f32 %v908, 1.442695
        %v910 = vpow.pop %v909
        %v911 = vsel %vm739, %v910, 0.0
        %912 = vadd.xlane.f32.xlu0 %v911
        %v913 = vpop.xlane.xlu0 %912
        %v914 = vrcp.pop %v913
        %v915 = vmul.f32 %v910, %v914
        %v916 = vpack.c.bf16 %v915, %v915
        %917 = vrot.lane.b32.xlu0 %v680, 48
        %v918 = vpop.permute.xlu0 %917
        %v920 = vsel %vm739, %v916, 0
        %v923 = vsel %vm757, %v918, 0
        %925 = vmatprep.subr.bf16.mxu0 0
        %926 = vmatpush1.bf16.msra.mxu0 %v923
        %927 = vmatprep.subr.bf16.mxu0 0
        %928 = vmatpush1.bf16.msra.mxu0 0
        %929 = vmatprep.subr.bf16.mxu0 0
        %930 = vmatpush1.bf16.msra.mxu0 0
        %931 = vmatprep.subr.bf16.mxu0 0
        %932 = vmatpush1.bf16.msra.mxu0 0
        %933 = vmatprep.subr.bf16.mxu0 0
        %934 = vmatpush1.bf16.msra.mxu0 0
        %935 = vmatprep.subr.bf16.mxu0 0
        %936 = vmatpush1.bf16.msra.mxu0 0
        %937 = vmatprep.subr.bf16.mxu0 0
        %938 = vmatpush1.bf16.msra.mxu0 0
        %939 = vmatprep.subr.bf16.mxu0 0
        %940 = vmatpush1.bf16.msra.mxu0 0
        %941 = vmatprep.subr.bf16.mxu0 0
        %942 = vmatpush1.bf16.msra.mxu0 0
        %943 = vmatprep.subr.bf16.mxu0 0
        %944 = vmatpush1.bf16.msra.mxu0 0
        %945 = vmatprep.subr.bf16.mxu0 0
        %946 = vmatpush1.bf16.msra.mxu0 0
        %947 = vmatprep.subr.bf16.mxu0 0
        %948 = vmatpush1.bf16.msra.mxu0 0
        %949 = vmatprep.subr.bf16.mxu0 0
        %950 = vmatpush1.bf16.msra.mxu0 0
        %951 = vmatprep.subr.bf16.mxu0 0
        %952 = vmatpush1.bf16.msra.mxu0 0
        %953 = vmatprep.subr.bf16.mxu0 0
        %954 = vmatpush1.bf16.msra.mxu0 0
        %955 = vmatprep.subr.bf16.mxu0 0
        %956 = vmatpush1.bf16.msra.mxu0 0
        %957 = vmatprep.mubr.bf16.mxu0 0
        %958 = vmatmul.mubr.bf16.gmra.mrb[0].mxu0 %v920
        %v959 = vpop.f32.mrb[0].mxu0
        %v960 = vadd.f32 0.0, %v959
        %v961 = vpop.f32.mrb[0].mxu0
        %v962 = vpop.f32.mrb[0].mxu0
        %v963 = vpop.f32.mrb[0].mxu0
        %964 = vdwg.mxu0
        %v965 = vpack.c.bf16 %v960, %v960
        %v966 = vpack.c.bf16 %v678, %v677
        %v968 = vsel %vm684, %v965, 0
        %970 = vmatprep.subr.bf16.mxu0 0
        %971 = vmatpush1.bf16.msra.mxu0 %v966
        %972 = vmatprep.subr.bf16.mxu0 0
        %973 = vmatpush1.bf16.msra.mxu0 0
        %974 = vmatprep.subr.bf16.mxu0 0
        %975 = vmatpush1.bf16.msra.mxu0 0
        %976 = vmatprep.subr.bf16.mxu0 0
        %977 = vmatpush1.bf16.msra.mxu0 0
        %978 = vmatprep.subr.bf16.mxu0 0
        %979 = vmatpush1.bf16.msra.mxu0 0
        %980 = vmatprep.subr.bf16.mxu0 0
        %981 = vmatpush1.bf16.msra.mxu0 0
        %982 = vmatprep.subr.bf16.mxu0 0
        %983 = vmatpush1.bf16.msra.mxu0 0
        %984 = vmatprep.subr.bf16.mxu0 0
        %985 = vmatpush1.bf16.msra.mxu0 0
        %986 = vmatprep.subr.bf16.mxu0 0
        %987 = vmatpush1.bf16.msra.mxu0 0
        %988 = vmatprep.subr.bf16.mxu0 0
        %989 = vmatpush1.bf16.msra.mxu0 0
        %990 = vmatprep.subr.bf16.mxu0 0
        %991 = vmatpush1.bf16.msra.mxu0 0
        %992 = vmatprep.subr.bf16.mxu0 0
        %993 = vmatpush1.bf16.msra.mxu0 0
        %994 = vmatprep.subr.bf16.mxu0 0
        %995 = vmatpush1.bf16.msra.mxu0 0
        %996 = vmatprep.subr.bf16.mxu0 0
        %997 = vmatpush1.bf16.msra.mxu0 0
        %998 = vmatprep.subr.bf16.mxu0 0
        %999 = vmatpush1.bf16.msra.mxu0 0
        %1000 = vmatprep.subr.bf16.mxu0 0
        %1001 = vmatpush1.bf16.msra.mxu0 0
        %1002 = vmatprep.mubr.bf16.mxu0 0
        %1003 = vmatmul.mubr.bf16.gmra.mrb[0].mxu0 %v968
        %v1004 = vpop.f32.mrb[0].mxu0
        %v1005 = vadd.f32 0.0, %v1004
        %v1006 = vpop.f32.mrb[0].mxu0
        %v1007 = vpop.f32.mrb[0].mxu0
        %v1008 = vpop.f32.mrb[0].mxu0
        %1009 = vdwg.mxu0
        %v1010 = vadd.f32 %v852, %v1005
        %v1011 = vadd.f32 %v616, %v1010
        %v1012 = vld [vmem:[%s8] sm:$0x1]
        %v1013 = vld [vmem:[%s9] sm:$0x1]
        %v1014 = vsel %vm588, %v1011, 0.0
        %1015 = vadd.xlane.f32.xlu0 %v1014
        %v1016 = vpop.xlane.xlu0 %1015
        %v1017 = vmul.f32 %v1016, %v592
        %v1018 = vsub.f32 %v1011, %v1017
        %v1019 = vmul.f32 %v1018, %v1018
        %v1020 = vsel %vm588, %v1019, 0.0
        %1021 = vadd.xlane.f32.xlu0 %v1020
        %v1022 = vpop.xlane.xlu0 %1021
        %v1023 = vmul.f32 %v1022, %v592
        %v1024 = vadd.f32 %v1023, 1e-12
        %v1025 = vrsqrt.pop %v1024
        %v1026 = vmul.f32 %v1018, %v1025
        %v1028 = vlaneseq
        %v1029 = vshrl.u32 %v1028, 7
        %v1030 = vsub.s32 0, %v1029
        %v1031 = vrot.slane %v1012, %v1030
        %v1033 = vmul.f32 %v1026, %v1031
        %v1035 = vlaneseq
        %v1036 = vshrl.u32 %v1035, 7
        %v1037 = vsub.s32 0, %v1036
        %v1038 = vrot.slane %v1013, %v1037
        %v1040 = vadd.f32 %v1033, %v1038
        %v1041 = vpack.c.bf16 %v1040, %v1040
        %v1042 = vld [vmem:[%s10] sm:$0xff]
        %v1043 = vld [vmem:[%s10 + $0x8] sm:$0xff]
        %v1044 = vld [vmem:[%s10 + $0x10] sm:$0xff]
        %v1045 = vld [vmem:[%s10 + $0x18] sm:$0xff]
        %v1046 = vpack.c.bf16 %v1043, %v1042
        %v1047 = vpack.c.bf16 %v1045, %v1044
        %v1048 = vld [vmem:[%s11] sm:$0x1]
        %v1050 = vlaneseq
        %v1051 = vshrl.u32 %v1050, 7
        %v1052 = vsub.s32 0, %v1051
        %v1053 = vrot.slane %v1048, %v1052
        %v1056 = vsel %vm588, %v1041, 0
        %1058 = vmatprep.subr.bf16.mxu0 0
        %1059 = vmatpush1.bf16.msra.mxu0 %v1046
        %1060 = vmatprep.subr.bf16.mxu0 0
        %1061 = vmatpush1.bf16.msra.mxu0 %v1047
        %1062 = vmatprep.subr.bf16.mxu0 0
        %1063 = vmatpush1.bf16.msra.mxu0 0
        %1064 = vmatprep.subr.bf16.mxu0 0
        %1065 = vmatpush1.bf16.msra.mxu0 0
        %1066 = vmatprep.subr.bf16.mxu0 0
        %1067 = vmatpush1.bf16.msra.mxu0 0
        %1068 = vmatprep.subr.bf16.mxu0 0
        %1069 = vmatpush1.bf16.msra.mxu0 0
        %1070 = vmatprep.subr.bf16.mxu0 0
        %1071 = vmatpush1.bf16.msra.mxu0 0
        %1072 = vmatprep.subr.bf16.mxu0 0
        %1073 = vmatpush1.bf16.msra.mxu0 0
        %1074 = vmatprep.subr.bf16.mxu0 0
        %1075 = vmatpush1.bf16.msra.mxu0 0
        %1076 = vmatprep.subr.bf16.mxu0 0
        %1077 = vmatpush1.bf16.msra.mxu0 0
        %1078 = vmatprep.subr.bf16.mxu0 0
        %1079 = vmatpush1.bf16.msra.mxu0 0
        %1080 = vmatprep.subr.bf16.mxu0 0
        %1081 = vmatpush1.bf16.msra.mxu0 0
        %1082 = vmatprep.subr.bf16.mxu0 0
        %1083 = vmatpush1.bf16.msra.mxu0 0
        %1084 = vmatprep.subr.bf16.mxu0 0
        %1085 = vmatpush1.bf16.msra.mxu0 0
        %1086 = vmatprep.subr.bf16.mxu0 0
        %1087 = vmatpush1.bf16.msra.mxu0 0
        %1088 = vmatprep.subr.bf16.mxu0 0
        %1089 = vmatpush1.bf16.msra.mxu0 0
        %1090 = vmatprep.mubr.bf16.mxu0 0
        %1091 = vmatmul.mubr.bf16.gmra.mrb[0].mxu0 %v1056
        %v1092 = vpop.f32.mrb[0].mxu0
        %v1093 = vadd.f32 %v1053, %v1092
        %v1094 = vpop.f32.mrb[0].mxu0
        %v1095 = vpop.f32.mrb[0].mxu0
        %v1096 = vpop.f32.mrb[0].mxu0
        %1097 = vdwg.mxu0
        %v1098 = vmul.f32 %v1093, 0.5
        %v1099 = vmul.f32 %v1093, 0.044715
        %v1100 = vmul.f32 %v1099, %v1093
        %v1101 = vmul.f32 %v1100, %v1093
        %v1102 = vadd.f32 %v1093, %v1101
        %v1103 = vmul.f32 %v1102, 0.7978846
        %v1104 = vtanh.pop %v1103
        %v1105 = vadd.f32 %v1104, 1.0
        %v1106 = vmul.f32 %v1098, %v1105
        %v1107 = vpack.c.bf16 %v1106, %v1106
        %v1108 = vld [vmem:[%s12] sm:$0xff]
        %v1109 = vld [vmem:[%s12 + $0x8] sm:$0xff]
        %v1110 = vld [vmem:[%s12 + $0x10] sm:$0xff]
        %v1111 = vld [vmem:[%s12 + $0x18] sm:$0xff]
        %v1112 = vld [vmem:[%s12 + $0x20] sm:$0xff]
        %v1113 = vld [vmem:[%s12 + $0x28] sm:$0xff]
        %v1114 = vld [vmem:[%s12 + $0x30] sm:$0xff]
        %v1115 = vld [vmem:[%s12 + $0x38] sm:$0xff]
        %v1116 = vpack.c.bf16 %v1109, %v1108
        %v1117 = vpack.c.bf16 %v1111, %v1110
        %v1118 = vpack.c.bf16 %v1113, %v1112
        %v1119 = vpack.c.bf16 %v1115, %v1114
        %v1120 = vld [vmem:[%s13] sm:$0x1]
        %v1122 = vlaneseq
        %v1123 = vshrl.u32 %v1122, 7
        %v1124 = vsub.s32 0, %v1123
        %v1125 = vrot.slane %v1120, %v1124
        %vm1127 = vcmask 523264
        %v1129 = vsel %vm1127, %v1107, 0
        %1131 = vmatprep.subr.bf16.mxu0 0
        %1132 = vmatpush1.bf16.msra.mxu0 %v1116
        %1133 = vmatprep.subr.bf16.mxu0 0
        %1134 = vmatpush1.bf16.msra.mxu0 %v1117
        %1135 = vmatprep.subr.bf16.mxu0 0
        %1136 = vmatpush1.bf16.msra.mxu0 %v1118
        %1137 = vmatprep.subr.bf16.mxu0 0
        %1138 = vmatpush1.bf16.msra.mxu0 %v1119
        %1139 = vmatprep.subr.bf16.mxu0 0
        %1140 = vmatpush1.bf16.msra.mxu0 0
        %1141 = vmatprep.subr.bf16.mxu0 0
        %1142 = vmatpush1.bf16.msra.mxu0 0
        %1143 = vmatprep.subr.bf16.mxu0 0
        %1144 = vmatpush1.bf16.msra.mxu0 0
        %1145 = vmatprep.subr.bf16.mxu0 0
        %1146 = vmatpush1.bf16.msra.mxu0 0
        %1147 = vmatprep.subr.bf16.mxu0 0
        %1148 = vmatpush1.bf16.msra.mxu0 0
        %1149 = vmatprep.subr.bf16.mxu0 0
        %1150 = vmatpush1.bf16.msra.mxu0 0
        %1151 = vmatprep.subr.bf16.mxu0 0
        %1152 = vmatpush1.bf16.msra.mxu0 0
        %1153 = vmatprep.subr.bf16.mxu0 0
        %1154 = vmatpush1.bf16.msra.mxu0 0
        %1155 = vmatprep.subr.bf16.mxu0 0
        %1156 = vmatpush1.bf16.msra.mxu0 0
        %1157 = vmatprep.subr.bf16.mxu0 0
        %1158 = vmatpush1.bf16.msra.mxu0 0
        %1159 = vmatprep.subr.bf16.mxu0 0
        %1160 = vmatpush1.bf16.msra.mxu0 0
        %1161 = vmatprep.subr.bf16.mxu0 0
        %1162 = vmatpush1.bf16.msra.mxu0 0
        %1163 = vmatprep.mubr.bf16.mxu0 0
        %1164 = vmatmul.mubr.bf16.gmra.mrb[0].mxu0 %v1129
        %v1165 = vpop.f32.mrb[0].mxu0
        %v1166 = vadd.f32 %v1125, %v1165
        %v1167 = vpop.f32.mrb[0].mxu0
        %v1168 = vpop.f32.mrb[0].mxu0
        %v1169 = vpop.f32.mrb[0].mxu0
        %1170 = vdwg.mxu0
        %v1171 = vadd.f32 %v1040, %v1166
        %v1172 = vld [vmem:[%s14] sm:$0x1]
        %v1173 = vld [vmem:[%s15] sm:$0x1]
        %v1174 = vsel %vm588, %v1171, 0.0
        %1175 = vadd.xlane.f32.xlu0 %v1174
        %v1176 = vpop.xlane.xlu0 %1175
        %v1177 = vmul.f32 %v1176, %v592
        %v1178 = vsub.f32 %v1171, %v1177
        %v1179 = vmul.f32 %v1178, %v1178
        %v1180 = vsel %vm588, %v1179, 0.0
        %1181 = vadd.xlane.f32.xlu0 %v1180
        %v1182 = vpop.xlane.xlu0 %1181
        %v1183 = vmul.f32 %v1182, %v592
        %v1184 = vadd.f32 %v1183, 1e-12
        %v1185 = vrsqrt.pop %v1184
        %v1186 = vmul.f32 %v1178, %v1185
        %v1188 = vlaneseq
        %v1189 = vshrl.u32 %v1188, 7
        %v1190 = vsub.s32 0, %v1189
        %v1191 = vrot.slane %v1172, %v1190
        %v1193 = vmul.f32 %v1186, %v1191
        %v1195 = vlaneseq
        %v1196 = vshrl.u32 %v1195, 7
        %v1197 = vsub.s32 0, %v1196
        %v1198 = vrot.slane %v1173, %v1197
        %v1200 = vadd.f32 %v1193, %v1198
        %v1201 = vpack.c.bf16 %v1200, %v1200
        %s1202 = scalar_lea.vmem %s4, 32
        %v1203 = vld [vmem:[%s1202] sm:$0xff]
        %v1204 = vld [vmem:[%s1202 + $0x8] sm:$0xff]
        %v1205 = vld [vmem:[%s1202 + $0x10] sm:$0xff]
        %v1206 = vld [vmem:[%s1202 + $0x18] sm:$0xff]
        %v1207 = vpack.c.bf16 %v1204, %v1203
        %v1208 = vpack.c.bf16 %v1206, %v1205
        %s1209 = scalar_lea.vmem %s5, 1
        %v1210 = vld [vmem:[%s1209] sm:$0x1]
        %v1212 = vlaneseq
        %v1213 = vshrl.u32 %v1212, 7
        %v1214 = vsub.s32 0, %v1213
        %v1215 = vrot.slane %v1210, %v1214
        %v1218 = vsel %vm588, %v1201, 0
        %1220 = vmatprep.subr.bf16.mxu0 0
        %1221 = vmatpush1.bf16.msra.mxu0 %v1207
        %1222 = vmatprep.subr.bf16.mxu0 0
        %1223 = vmatpush1.bf16.msra.mxu0 %v1208
        %1224 = vmatprep.subr.bf16.mxu0 0
        %1225 = vmatpush1.bf16.msra.mxu0 0
        %1226 = vmatprep.subr.bf16.mxu0 0
        %1227 = vmatpush1.bf16.msra.mxu0 0
        %1228 = vmatprep.subr.bf16.mxu0 0
        %1229 = vmatpush1.bf16.msra.mxu0 0
        %1230 = vmatprep.subr.bf16.mxu0 0
        %1231 = vmatpush1.bf16.msra.mxu0 0
        %1232 = vmatprep.subr.bf16.mxu0 0
        %1233 = vmatpush1.bf16.msra.mxu0 0
        %1234 = vmatprep.subr.bf16.mxu0 0
        %1235 = vmatpush1.bf16.msra.mxu0 0
        %1236 = vmatprep.subr.bf16.mxu0 0
        %1237 = vmatpush1.bf16.msra.mxu0 0
        %1238 = vmatprep.subr.bf16.mxu0 0
        %1239 = vmatpush1.bf16.msra.mxu0 0
        %1240 = vmatprep.subr.bf16.mxu0 0
        %1241 = vmatpush1.bf16.msra.mxu0 0
        %1242 = vmatprep.subr.bf16.mxu0 0
        %1243 = vmatpush1.bf16.msra.mxu0 0
        %1244 = vmatprep.subr.bf16.mxu0 0
        %1245 = vmatpush1.bf16.msra.mxu0 0
        %1246 = vmatprep.subr.bf16.mxu0 0
        %1247 = vmatpush1.bf16.msra.mxu0 0
        %1248 = vmatprep.subr.bf16.mxu0 0
        %1249 = vmatpush1.bf16.msra.mxu0 0
        %1250 = vmatprep.subr.bf16.mxu0 0
        %1251 = vmatpush1.bf16.msra.mxu0 0
        %1252 = vmatprep.mubr.bf16.mxu0 0
        %1253 = vmatmul.mubr.bf16.gmra.mrb[0].mxu0 %v1218
        %v1254 = vpop.f32.mrb[0].mxu0
        %v1255 = vadd.f32 %v1215, %v1254
        %v1256 = vpop.f32.mrb[0].mxu0
        %v1257 = vpop.f32.mrb[0].mxu0
        %v1258 = vpop.f32.mrb[0].mxu0
        %1259 = vdwg.mxu0
        %s1260 = scalar_lea.vmem %s6, 32
        %v1261 = vld [vmem:[%s1260] sm:$0xff]
        %v1262 = vld [vmem:[%s1260 + $0x8] sm:$0xff]
        %v1263 = vld [vmem:[%s1260 + $0x10] sm:$0xff]
        %v1264 = vld [vmem:[%s1260 + $0x18] sm:$0xff]
        %s1265 = scalar_lea.vmem %s7, 1
        %v1266 = vld [vmem:[%s1265] sm:$0x1]
        %v1267 = vpack.c.bf16 %v1255, %v1255
        %1269 = vrot.lane.b32.xlu0 %v1267, 96
        %v1270 = vpop.permute.xlu0 %1269
        %v1272 = vsel %vm684, %v1267, 0
        %v1275 = vsel %vm684, %v1270, 0
        %1277 = vmatprep.subr.bf16.mxu0 0
        %1278 = vmatpush1.bf16.xpose.msra.mxu0 %v1275
        %1279 = vmatprep.subr.bf16.mxu0 0
        %1280 = vmatpush1.bf16.xpose.msra.mxu0 0
        %1281 = vmatprep.subr.bf16.mxu0 0
        %1282 = vmatpush1.bf16.xpose.msra.mxu0 0
        %1283 = vmatprep.subr.bf16.mxu0 0
        %1284 = vmatpush1.bf16.xpose.msra.mxu0 0
        %1285 = vmatprep.subr.bf16.mxu0 0
        %1286 = vmatpush1.bf16.xpose.msra.mxu0 0
        %1287 = vmatprep.subr.bf16.mxu0 0
        %1288 = vmatpush1.bf16.xpose.msra.mxu0 0
        %1289 = vmatprep.subr.bf16.mxu0 0
        %1290 = vmatpush1.bf16.xpose.msra.mxu0 0
        %1291 = vmatprep.subr.bf16.mxu0 0
        %1292 = vmatpush1.bf16.xpose.msra.mxu0 0
        %1293 = vmatprep.subr.bf16.mxu0 0
        %1294 = vmatpush1.bf16.xpose.msra.mxu0 0
        %1295 = vmatprep.subr.bf16.mxu0 0
        %1296 = vmatpush1.bf16.xpose.msra.mxu0 0
        %1297 = vmatprep.subr.bf16.mxu0 0
        %1298 = vmatpush1.bf16.xpose.msra.mxu0 0
        %1299 = vmatprep.subr.bf16.mxu0 0
        %1300 = vmatpush1.bf16.xpose.msra.mxu0 0
        %1301 = vmatprep.subr.bf16.mxu0 0
        %1302 = vmatpush1.bf16.xpose.msra.mxu0 0
        %1303 = vmatprep.subr.bf16.mxu0 0
        %1304 = vmatpush1.bf16.xpose.msra.mxu0 0
        %1305 = vmatprep.subr.bf16.mxu0 0
        %1306 = vmatpush1.bf16.xpose.msra.mxu0 0
        %1307 = vmatprep.subr.bf16.mxu0 0
        %1308 = vmatpush1.bf16.xpose.msra.mxu0 0
        %1309 = vmatprep.mubr.bf16.mxu0 0
        %1310 = vmatmul.mubr.bf16.gmra.mrb[0].mxu0 %v1272
        %v1311 = vpop.f32.mrb[0].mxu0
        %v1312 = vadd.f32 0.0, %v1311
        %v1313 = vpop.f32.mrb[0].mxu0
        %v1314 = vpop.f32.mrb[0].mxu0
        %v1315 = vpop.f32.mrb[0].mxu0
        %1316 = vdwg.mxu0
        %v1317 = vmul.f32 %v1312, 0.25
        %v1318 = vadd.f32 %v1317, %v736
        %v1319 = vsel %vm739, %v1318, -inf
        %1320 = vmax.xlane.f32.xlu0 %v1319
        %v1321 = vpop.xlane.xlu0 %1320
        %v1322 = vsub.f32 %v1318, %v1321
        %v1323 = vmul.f32 %v1322, 1.442695
        %v1324 = vpow.pop %v1323
        %v1325 = vsel %vm739, %v1324, 0.0
        %1326 = vadd.xlane.f32.xlu0 %v1325
        %v1327 = vpop.xlane.xlu0 %1326
        %v1328 = vrcp.pop %v1327
        %v1329 = vmul.f32 %v1324, %v1328
        %v1330 = vpack.c.bf16 %v1329, %v1329
        %1331 = vrot.lane.b32.xlu0 %v1267, 64
        %v1332 = vpop.permute.xlu0 %1331
        %v1334 = vsel %vm739, %v1330, 0
        %v1337 = vsel %vm757, %v1332, 0
        %1339 = vmatprep.subr.bf16.mxu0 0
        %1340 = vmatpush1.bf16.msra.mxu0 %v1337
        %1341 = vmatprep.subr.bf16.mxu0 0
        %1342 = vmatpush1.bf16.msra.mxu0 0
        %1343 = vmatprep.subr.bf16.mxu0 0
        %1344 = vmatpush1.bf16.msra.mxu0 0
        %1345 = vmatprep.subr.bf16.mxu0 0
        %1346 = vmatpush1.bf16.msra.mxu0 0
        %1347 = vmatprep.subr.bf16.mxu0 0
        %1348 = vmatpush1.bf16.msra.mxu0 0
        %1349 = vmatprep.subr.bf16.mxu0 0
        %1350 = vmatpush1.bf16.msra.mxu0 0
        %1351 = vmatprep.subr.bf16.mxu0 0
        %1352 = vmatpush1.bf16.msra.mxu0 0
        %1353 = vmatprep.subr.bf16.mxu0 0
        %1354 = vmatpush1.bf16.msra.mxu0 0
        %1355 = vmatprep.subr.bf16.mxu0 0
        %1356 = vmatpush1.bf16.msra.mxu0 0
        %1357 = vmatprep.subr.bf16.mxu0 0
        %1358 = vmatpush1.bf16.msra.mxu0 0
        %1359 = vmatprep.subr.bf16.mxu0 0
        %1360 = vmatpush1.bf16.msra.mxu0 0
        %1361 = vmatprep.subr.bf16.mxu0 0
        %1362 = vmatpush1.bf16.msra.mxu0 0
        %1363 = vmatprep.subr.bf16.mxu0 0
        %1364 = vmatpush1.bf16.msra.mxu0 0
        %1365 = vmatprep.subr.bf16.mxu0 0
        %1366 = vmatpush1.bf16.msra.mxu0 0
        %1367 = vmatprep.subr.bf16.mxu0 0
        %1368 = vmatpush1.bf16.msra.mxu0 0
        %1369 = vmatprep.subr.bf16.mxu0 0
        %1370 = vmatpush1.bf16.msra.mxu0 0
        %1371 = vmatprep.mubr.bf16.mxu0 0
        %1372 = vmatmul.mubr.bf16.gmra.mrb[0].mxu0 %v1334
        %v1373 = vpop.f32.mrb[0].mxu0
        %v1374 = vadd.f32 0.0, %v1373
        %v1375 = vpop.f32.mrb[0].mxu0
        %v1376 = vpop.f32.mrb[0].mxu0
        %v1377 = vpop.f32.mrb[0].mxu0
        %1378 = vdwg.mxu0
        %v1379 = vpack.c.bf16 %v1374, %v1374
        %v1380 = vpack.c.bf16 %v1262, %v1261
        %v1382 = vsel %vm684, %v1379, 0
        %1384 = vmatprep.subr.bf16.mxu0 0
        %1385 = vmatpush1.bf16.msra.mxu0 %v1380
        %1386 = vmatprep.subr.bf16.mxu0 0
        %1387 = vmatpush1.bf16.msra.mxu0 0
        %1388 = vmatprep.subr.bf16.mxu0 0
        %1389 = vmatpush1.bf16.msra.mxu0 0
        %1390 = vmatprep.subr.bf16.mxu0 0
        %1391 = vmatpush1.bf16.msra.mxu0 0
        %1392 = vmatprep.subr.bf16.mxu0 0
        %1393 = vmatpush1.bf16.msra.mxu0 0
        %1394 = vmatprep.subr.bf16.mxu0 0
        %1395 = vmatpush1.bf16.msra.mxu0 0
        %1396 = vmatprep.subr.bf16.mxu0 0
        %1397 = vmatpush1.bf16.msra.mxu0 0
        %1398 = vmatprep.subr.bf16.mxu0 0
        %1399 = vmatpush1.bf16.msra.mxu0 0
        %1400 = vmatprep.subr.bf16.mxu0 0
        %1401 = vmatpush1.bf16.msra.mxu0 0
        %1402 = vmatprep.subr.bf16.mxu0 0
        %1403 = vmatpush1.bf16.msra.mxu0 0
        %1404 = vmatprep.subr.bf16.mxu0 0
        %1405 = vmatpush1.bf16.msra.mxu0 0
        %1406 = vmatprep.subr.bf16.mxu0 0
        %1407 = vmatpush1.bf16.msra.mxu0 0
        %1408 = vmatprep.subr.bf16.mxu0 0
        %1409 = vmatpush1.bf16.msra.mxu0 0
        %1410 = vmatprep.subr.bf16.mxu0 0
        %1411 = vmatpush1.bf16.msra.mxu0 0
        %1412 = vmatprep.subr.bf16.mxu0 0
        %1413 = vmatpush1.bf16.msra.mxu0 0
        %1414 = vmatprep.subr.bf16.mxu0 0
        %1415 = vmatpush1.bf16.msra.mxu0 0
        %1416 = vmatprep.mubr.bf16.mxu0 0
        %1417 = vmatmul.mubr.bf16.gmra.mrb[0].mxu0 %v1382
        %v1418 = vpop.f32.mrb[0].mxu0
        %v1419 = vadd.f32 0.0, %v1418
        %v1420 = vpop.f32.mrb[0].mxu0
        %v1421 = vpop.f32.mrb[0].mxu0
        %v1422 = vpop.f32.mrb[0].mxu0
        %1423 = vdwg.mxu0
        %v1425 = vlaneseq
        %v1426 = vshrl.u32 %v1425, 7
        %v1427 = vsub.s32 0, %v1426
        %v1428 = vrot.slane %v1266, %v1427
        %v1430 = vadd.f32 %v1428, %v1419
        %1431 = vrot.lane.b32.xlu0 %v1267, 112
        %v1432 = vpop.permute.xlu0 %1431
        %1433 = vrot.lane.b32.xlu0 %v1267, 80
        %v1434 = vpop.permute.xlu0 %1433
        %v1436 = vsel %vm684, %v1432, 0
        %v1439 = vsel %vm684, %v1434, 0
        %1441 = vmatprep.subr.bf16.mxu0 0
        %1442 = vmatpush1.bf16.xpose.msra.mxu0 %v1439
        %1443 = vmatprep.subr.bf16.mxu0 0
        %1444 = vmatpush1.bf16.xpose.msra.mxu0 0
        %1445 = vmatprep.subr.bf16.mxu0 0
        %1446 = vmatpush1.bf16.xpose.msra.mxu0 0
        %1447 = vmatprep.subr.bf16.mxu0 0
        %1448 = vmatpush1.bf16.xpose.msra.mxu0 0
        %1449 = vmatprep.subr.bf16.mxu0 0
        %1450 = vmatpush1.bf16.xpose.msra.mxu0 0
        %1451 = vmatprep.subr.bf16.mxu0 0
        %1452 = vmatpush1.bf16.xpose.msra.mxu0 0
        %1453 = vmatprep.subr.bf16.mxu0 0
        %1454 = vmatpush1.bf16.xpose.msra.mxu0 0
        %1455 = vmatprep.subr.bf16.mxu0 0
        %1456 = vmatpush1.bf16.xpose.msra.mxu0 0
        %1457 = vmatprep.subr.bf16.mxu0 0
        %1458 = vmatpush1.bf16.xpose.msra.mxu0 0
        %1459 = vmatprep.subr.bf16.mxu0 0
        %1460 = vmatpush1.bf16.xpose.msra.mxu0 0
        %1461 = vmatprep.subr.bf16.mxu0 0
        %1462 = vmatpush1.bf16.xpose.msra.mxu0 0
        %1463 = vmatprep.subr.bf16.mxu0 0
        %1464 = vmatpush1.bf16.xpose.msra.mxu0 0
        %1465 = vmatprep.subr.bf16.mxu0 0
        %1466 = vmatpush1.bf16.xpose.msra.mxu0 0
        %1467 = vmatprep.subr.bf16.mxu0 0
        %1468 = vmatpush1.bf16.xpose.msra.mxu0 0
        %1469 = vmatprep.subr.bf16.mxu0 0
        %1470 = vmatpush1.bf16.xpose.msra.mxu0 0
        %1471 = vmatprep.subr.bf16.mxu0 0
        %1472 = vmatpush1.bf16.xpose.msra.mxu0 0
        %1473 = vmatprep.mubr.bf16.mxu0 0
        %1474 = vmatmul.mubr.bf16.gmra.mrb[0].mxu0 %v1436
        %v1475 = vpop.f32.mrb[0].mxu0
        %v1476 = vadd.f32 0.0, %v1475
        %v1477 = vpop.f32.mrb[0].mxu0
        %v1478 = vpop.f32.mrb[0].mxu0
        %v1479 = vpop.f32.mrb[0].mxu0
        %1480 = vdwg.mxu0
        %v1481 = vmul.f32 %v1476, 0.25
        %v1482 = vadd.f32 %v1481, %v736
        %v1483 = vsel %vm739, %v1482, -inf
        %1484 = vmax.xlane.f32.xlu0 %v1483
        %v1485 = vpop.xlane.xlu0 %1484
        %v1486 = vsub.f32 %v1482, %v1485
        %v1487 = vmul.f32 %v1486, 1.442695
        %v1488 = vpow.pop %v1487
        %v1489 = vsel %vm739, %v1488, 0.0
        %1490 = vadd.xlane.f32.xlu0 %v1489
        %v1491 = vpop.xlane.xlu0 %1490
        %v1492 = vrcp.pop %v1491
        %v1493 = vmul.f32 %v1488, %v1492
        %v1494 = vpack.c.bf16 %v1493, %v1493
        %1495 = vrot.lane.b32.xlu0 %v1267, 48
        %v1496 = vpop.permute.xlu0 %1495
        %v1498 = vsel %vm739, %v1494, 0
        %v1501 = vsel %vm757, %v1496, 0
        %1503 = vmatprep.subr.bf16.mxu0 0
        %1504 = vmatpush1.bf16.msra.mxu0 %v1501
        %1505 = vmatprep.subr.bf16.mxu0 0
        %1506 = vmatpush1.bf16.msra.mxu0 0
        %1507 = vmatprep.subr.bf16.mxu0 0
        %1508 = vmatpush1.bf16.msra.mxu0 0
        %1509 = vmatprep.subr.bf16.mxu0 0
        %1510 = vmatpush1.bf16.msra.mxu0 0
        %1511 = vmatprep.subr.bf16.mxu0 0
        %1512 = vmatpush1.bf16.msra.mxu0 0
        %1513 = vmatprep.subr.bf16.mxu0 0
        %1514 = vmatpush1.bf16.msra.mxu0 0
        %1515 = vmatprep.subr.bf16.mxu0 0
        %1516 = vmatpush1.bf16.msra.mxu0 0
        %1517 = vmatprep.subr.bf16.mxu0 0
        %1518 = vmatpush1.bf16.msra.mxu0 0
        %1519 = vmatprep.subr.bf16.mxu0 0
        %1520 = vmatpush1.bf16.msra.mxu0 0
        %1521 = vmatprep.subr.bf16.mxu0 0
        %1522 = vmatpush1.bf16.msra.mxu0 0
        %1523 = vmatprep.subr.bf16.mxu0 0
        %1524 = vmatpush1.bf16.msra.mxu0 0
        %1525 = vmatprep.subr.bf16.mxu0 0
        %1526 = vmatpush1.bf16.msra.mxu0 0
        %1527 = vmatprep.subr.bf16.mxu0 0
        %1528 = vmatpush1.bf16.msra.mxu0 0
        %1529 = vmatprep.subr.bf16.mxu0 0
        %1530 = vmatpush1.bf16.msra.mxu0 0
        %1531 = vmatprep.subr.bf16.mxu0 0
        %1532 = vmatpush1.bf16.msra.mxu0 0
        %1533 = vmatprep.subr.bf16.mxu0 0
        %1534 = vmatpush1.bf16.msra.mxu0 0
        %1535 = vmatprep.mubr.bf16.mxu0 0
        %1536 = vmatmul.mubr.bf16.gmra.mrb[0].mxu0 %v1498
        %v1537 = vpop.f32.mrb[0].mxu0
        %v1538 = vadd.f32 0.0, %v1537
        %v1539 = vpop.f32.mrb[0].mxu0
        %v1540 = vpop.f32.mrb[0].mxu0
        %v1541 = vpop.f32.mrb[0].mxu0
        %1542 = vdwg.mxu0
        %v1543 = vpack.c.bf16 %v1538, %v1538
        %v1544 = vpack.c.bf16 %v1264, %v1263
        %v1546 = vsel %vm684, %v1543, 0
        %1548 = vmatprep.subr.bf16.mxu0 0
        %1549 = vmatpush1.bf16.msra.mxu0 %v1544
        %1550 = vmatprep.subr.bf16.mxu0 0
        %1551 = vmatpush1.bf16.msra.mxu0 0
        %1552 = vmatprep.subr.bf16.mxu0 0
        %1553 = vmatpush1.bf16.msra.mxu0 0
        %1554 = vmatprep.subr.bf16.mxu0 0
        %1555 = vmatpush1.bf16.msra.mxu0 0
        %1556 = vmatprep.subr.bf16.mxu0 0
        %1557 = vmatpush1.bf16.msra.mxu0 0
        %1558 = vmatprep.subr.bf16.mxu0 0
        %1559 = vmatpush1.bf16.msra.mxu0 0
        %1560 = vmatprep.subr.bf16.mxu0 0
        %1561 = vmatpush1.bf16.msra.mxu0 0
        %1562 = vmatprep.subr.bf16.mxu0 0
        %1563 = vmatpush1.bf16.msra.mxu0 0
        %1564 = vmatprep.subr.bf16.mxu0 0
        %1565 = vmatpush1.bf16.msra.mxu0 0
        %1566 = vmatprep.subr.bf16.mxu0 0
        %1567 = vmatpush1.bf16.msra.mxu0 0
        %1568 = vmatprep.subr.bf16.mxu0 0
        %1569 = vmatpush1.bf16.msra.mxu0 0
        %1570 = vmatprep.subr.bf16.mxu0 0
        %1571 = vmatpush1.bf16.msra.mxu0 0
        %1572 = vmatprep.subr.bf16.mxu0 0
        %1573 = vmatpush1.bf16.msra.mxu0 0
        %1574 = vmatprep.subr.bf16.mxu0 0
        %1575 = vmatpush1.bf16.msra.mxu0 0
        %1576 = vmatprep.subr.bf16.mxu0 0
        %1577 = vmatpush1.bf16.msra.mxu0 0
        %1578 = vmatprep.subr.bf16.mxu0 0
        %1579 = vmatpush1.bf16.msra.mxu0 0
        %1580 = vmatprep.mubr.bf16.mxu0 0
        %1581 = vmatmul.mubr.bf16.gmra.mrb[0].mxu0 %v1546
        %v1582 = vpop.f32.mrb[0].mxu0
        %v1583 = vadd.f32 0.0, %v1582
        %v1584 = vpop.f32.mrb[0].mxu0
        %v1585 = vpop.f32.mrb[0].mxu0
        %v1586 = vpop.f32.mrb[0].mxu0
        %1587 = vdwg.mxu0
        %v1588 = vadd.f32 %v1430, %v1583
        %v1589 = vadd.f32 %v1200, %v1588
        %s1590 = scalar_lea.vmem %s8, 1
        %v1591 = vld [vmem:[%s1590] sm:$0x1]
        %s1592 = scalar_lea.vmem %s9, 1
        %v1593 = vld [vmem:[%s1592] sm:$0x1]
        %v1594 = vsel %vm588, %v1589, 0.0
        %1595 = vadd.xlane.f32.xlu0 %v1594
        %v1596 = vpop.xlane.xlu0 %1595
        %v1597 = vmul.f32 %v1596, %v592
        %v1598 = vsub.f32 %v1589, %v1597
        %v1599 = vmul.f32 %v1598, %v1598
        %v1600 = vsel %vm588, %v1599, 0.0
        %1601 = vadd.xlane.f32.xlu0 %v1600
        %v1602 = vpop.xlane.xlu0 %1601
        %v1603 = vmul.f32 %v1602, %v592
        %v1604 = vadd.f32 %v1603, 1e-12
        %v1605 = vrsqrt.pop %v1604
        %v1606 = vmul.f32 %v1598, %v1605
        %v1608 = vlaneseq
        %v1609 = vshrl.u32 %v1608, 7
        %v1610 = vsub.s32 0, %v1609
        %v1611 = vrot.slane %v1591, %v1610
        %v1613 = vmul.f32 %v1606, %v1611
        %v1615 = vlaneseq
        %v1616 = vshrl.u32 %v1615, 7
        %v1617 = vsub.s32 0, %v1616
        %v1618 = vrot.slane %v1593, %v1617
        %v1620 = vadd.f32 %v1613, %v1618
        %v1621 = vpack.c.bf16 %v1620, %v1620
        %s1622 = scalar_lea.vmem %s10, 32
        %v1623 = vld [vmem:[%s1622] sm:$0xff]
        %v1624 = vld [vmem:[%s1622 + $0x8] sm:$0xff]
        %v1625 = vld [vmem:[%s1622 + $0x10] sm:$0xff]
        %v1626 = vld [vmem:[%s1622 + $0x18] sm:$0xff]
        %v1627 = vpack.c.bf16 %v1624, %v1623
        %v1628 = vpack.c.bf16 %v1626, %v1625
        %s1629 = scalar_lea.vmem %s11, 1
        %v1630 = vld [vmem:[%s1629] sm:$0x1]
        %v1632 = vlaneseq
        %v1633 = vshrl.u32 %v1632, 7
        %v1634 = vsub.s32 0, %v1633
        %v1635 = vrot.slane %v1630, %v1634
        %v1638 = vsel %vm588, %v1621, 0
        %1640 = vmatprep.subr.bf16.mxu0 0
        %1641 = vmatpush1.bf16.msra.mxu0 %v1627
        %1642 = vmatprep.subr.bf16.mxu0 0
        %1643 = vmatpush1.bf16.msra.mxu0 %v1628
        %1644 = vmatprep.subr.bf16.mxu0 0
        %1645 = vmatpush1.bf16.msra.mxu0 0
        %1646 = vmatprep.subr.bf16.mxu0 0
        %1647 = vmatpush1.bf16.msra.mxu0 0
        %1648 = vmatprep.subr.bf16.mxu0 0
        %1649 = vmatpush1.bf16.msra.mxu0 0
        %1650 = vmatprep.subr.bf16.mxu0 0
        %1651 = vmatpush1.bf16.msra.mxu0 0
        %1652 = vmatprep.subr.bf16.mxu0 0
        %1653 = vmatpush1.bf16.msra.mxu0 0
        %1654 = vmatprep.subr.bf16.mxu0 0
        %1655 = vmatpush1.bf16.msra.mxu0 0
        %1656 = vmatprep.subr.bf16.mxu0 0
        %1657 = vmatpush1.bf16.msra.mxu0 0
        %1658 = vmatprep.subr.bf16.mxu0 0
        %1659 = vmatpush1.bf16.msra.mxu0 0
        %1660 = vmatprep.subr.bf16.mxu0 0
        %1661 = vmatpush1.bf16.msra.mxu0 0
        %1662 = vmatprep.subr.bf16.mxu0 0
        %1663 = vmatpush1.bf16.msra.mxu0 0
        %1664 = vmatprep.subr.bf16.mxu0 0
        %1665 = vmatpush1.bf16.msra.mxu0 0
        %1666 = vmatprep.subr.bf16.mxu0 0
        %1667 = vmatpush1.bf16.msra.mxu0 0
        %1668 = vmatprep.subr.bf16.mxu0 0
        %1669 = vmatpush1.bf16.msra.mxu0 0
        %1670 = vmatprep.subr.bf16.mxu0 0
        %1671 = vmatpush1.bf16.msra.mxu0 0
        %1672 = vmatprep.mubr.bf16.mxu0 0
        %1673 = vmatmul.mubr.bf16.gmra.mrb[0].mxu0 %v1638
        %v1674 = vpop.f32.mrb[0].mxu0
        %v1675 = vadd.f32 %v1635, %v1674
        %v1676 = vpop.f32.mrb[0].mxu0
        %v1677 = vpop.f32.mrb[0].mxu0
        %v1678 = vpop.f32.mrb[0].mxu0
        %1679 = vdwg.mxu0
        %v1680 = vmul.f32 %v1675, 0.5
        %v1681 = vmul.f32 %v1675, 0.044715
        %v1682 = vmul.f32 %v1681, %v1675
        %v1683 = vmul.f32 %v1682, %v1675
        %v1684 = vadd.f32 %v1675, %v1683
        %v1685 = vmul.f32 %v1684, 0.7978846
        %v1686 = vtanh.pop %v1685
        %v1687 = vadd.f32 %v1686, 1.0
        %v1688 = vmul.f32 %v1680, %v1687
        %v1689 = vpack.c.bf16 %v1688, %v1688
        %s1690 = scalar_lea.vmem %s12, 64
        %v1691 = vld [vmem:[%s1690] sm:$0xff]
        %v1692 = vld [vmem:[%s1690 + $0x8] sm:$0xff]
        %v1693 = vld [vmem:[%s1690 + $0x10] sm:$0xff]
        %v1694 = vld [vmem:[%s1690 + $0x18] sm:$0xff]
        %v1695 = vld [vmem:[%s1690 + $0x20] sm:$0xff]
        %v1696 = vld [vmem:[%s1690 + $0x28] sm:$0xff]
        %v1697 = vld [vmem:[%s1690 + $0x30] sm:$0xff]
        %v1698 = vld [vmem:[%s1690 + $0x38] sm:$0xff]
        %v1699 = vpack.c.bf16 %v1692, %v1691
        %v1700 = vpack.c.bf16 %v1694, %v1693
        %v1701 = vpack.c.bf16 %v1696, %v1695
        %v1702 = vpack.c.bf16 %v1698, %v1697
        %s1703 = scalar_lea.vmem %s13, 1
        %v1704 = vld [vmem:[%s1703] sm:$0x1]
        %v1706 = vlaneseq
        %v1707 = vshrl.u32 %v1706, 7
        %v1708 = vsub.s32 0, %v1707
        %v1709 = vrot.slane %v1704, %v1708
        %v1712 = vsel %vm1127, %v1689, 0
        %1714 = vmatprep.subr.bf16.mxu0 0
        %1715 = vmatpush1.bf16.msra.mxu0 %v1699
        %1716 = vmatprep.subr.bf16.mxu0 0
        %1717 = vmatpush1.bf16.msra.mxu0 %v1700
        %1718 = vmatprep.subr.bf16.mxu0 0
        %1719 = vmatpush1.bf16.msra.mxu0 %v1701
        %1720 = vmatprep.subr.bf16.mxu0 0
        %1721 = vmatpush1.bf16.msra.mxu0 %v1702
        %1722 = vmatprep.subr.bf16.mxu0 0
        %1723 = vmatpush1.bf16.msra.mxu0 0
        %1724 = vmatprep.subr.bf16.mxu0 0
        %1725 = vmatpush1.bf16.msra.mxu0 0
        %1726 = vmatprep.subr.bf16.mxu0 0
        %1727 = vmatpush1.bf16.msra.mxu0 0
        %1728 = vmatprep.subr.bf16.mxu0 0
        %1729 = vmatpush1.bf16.msra.mxu0 0
        %1730 = vmatprep.subr.bf16.mxu0 0
        %1731 = vmatpush1.bf16.msra.mxu0 0
        %1732 = vmatprep.subr.bf16.mxu0 0
        %1733 = vmatpush1.bf16.msra.mxu0 0
        %1734 = vmatprep.subr.bf16.mxu0 0
        %1735 = vmatpush1.bf16.msra.mxu0 0
        %1736 = vmatprep.subr.bf16.mxu0 0
        %1737 = vmatpush1.bf16.msra.mxu0 0
        %1738 = vmatprep.subr.bf16.mxu0 0
        %1739 = vmatpush1.bf16.msra.mxu0 0
        %1740 = vmatprep.subr.bf16.mxu0 0
        %1741 = vmatpush1.bf16.msra.mxu0 0
        %1742 = vmatprep.subr.bf16.mxu0 0
        %1743 = vmatpush1.bf16.msra.mxu0 0
        %1744 = vmatprep.subr.bf16.mxu0 0
        %1745 = vmatpush1.bf16.msra.mxu0 0
        %1746 = vmatprep.mubr.bf16.mxu0 0
        %1747 = vmatmul.mubr.bf16.gmra.mrb[0].mxu0 %v1712
        %v1748 = vpop.f32.mrb[0].mxu0
        %v1749 = vadd.f32 %v1709, %v1748
        %v1750 = vpop.f32.mrb[0].mxu0
        %v1751 = vpop.f32.mrb[0].mxu0
        %v1752 = vpop.f32.mrb[0].mxu0
        %1753 = vdwg.mxu0
        %v1754 = vadd.f32 %v1620, %v1749
        %s1755 = scalar_lea.vmem %s14, 1
        %v1756 = vld [vmem:[%s1755] sm:$0x1]
        %s1757 = scalar_lea.vmem %s15, 1
        %v1758 = vld [vmem:[%s1757] sm:$0x1]
        %v1759 = vsel %vm588, %v1754, 0.0
        %1760 = vadd.xlane.f32.xlu0 %v1759
        %v1761 = vpop.xlane.xlu0 %1760
        %v1762 = vmul.f32 %v1761, %v592
        %v1763 = vsub.f32 %v1754, %v1762
        %v1764 = vmul.f32 %v1763, %v1763
        %v1765 = vsel %vm588, %v1764, 0.0
        %1766 = vadd.xlane.f32.xlu0 %v1765
        %v1767 = vpop.xlane.xlu0 %1766
        %v1768 = vmul.f32 %v1767, %v592
        %v1769 = vadd.f32 %v1768, 1e-12
        %v1770 = vrsqrt.pop %v1769
        %v1771 = vmul.f32 %v1763, %v1770
        %v1773 = vlaneseq
        %v1774 = vshrl.u32 %v1773, 7
        %v1775 = vsub.s32 0, %v1774
        %v1776 = vrot.slane %v1756, %v1775
        %v1778 = vmul.f32 %v1771, %v1776
        %v1780 = vlaneseq
        %v1781 = vshrl.u32 %v1780, 7
        %v1782 = vsub.s32 0, %v1781
        %v1783 = vrot.slane %v1758, %v1782
        %v1785 = vadd.f32 %v1778, %v1783
        %v1786 = vpack.c.bf16 %v1785, %v1785
        %v1787 = vld [vmem:[%s16] sm:$0xff]
        %v1788 = vld [vmem:[%s16 + $0x8] sm:$0xff]
        %v1789 = vld [vmem:[%s16 + $0x10] sm:$0xff]
        %v1790 = vld [vmem:[%s16 + $0x18] sm:$0xff]
        %v1791 = vpack.c.bf16 %v1788, %v1787
        %v1792 = vpack.c.bf16 %v1790, %v1789
        %v1793 = vld [vmem:[%s17] sm:$0x1]
        %v1795 = vsel %vm588, %v1786, 0
        %1797 = vmatprep.subr.bf16.mxu0 0
        %1798 = vmatpush1.bf16.msra.mxu0 %v1791
        %1799 = vmatprep.subr.bf16.mxu0 0
        %1800 = vmatpush1.bf16.msra.mxu0 %v1792
        %1801 = vmatprep.subr.bf16.mxu0 0
        %1802 = vmatpush1.bf16.msra.mxu0 0
        %1803 = vmatprep.subr.bf16.mxu0 0
        %1804 = vmatpush1.bf16.msra.mxu0 0
        %1805 = vmatprep.subr.bf16.mxu0 0
        %1806 = vmatpush1.bf16.msra.mxu0 0
        %1807 = vmatprep.subr.bf16.mxu0 0
        %1808 = vmatpush1.bf16.msra.mxu0 0
        %1809 = vmatprep.subr.bf16.mxu0 0
        %1810 = vmatpush1.bf16.msra.mxu0 0
        %1811 = vmatprep.subr.bf16.mxu0 0
        %1812 = vmatpush1.bf16.msra.mxu0 0
        %1813 = vmatprep.subr.bf16.mxu0 0
        %1814 = vmatpush1.bf16.msra.mxu0 0
        %1815 = vmatprep.subr.bf16.mxu0 0
        %1816 = vmatpush1.bf16.msra.mxu0 0
        %1817 = vmatprep.subr.bf16.mxu0 0
        %1818 = vmatpush1.bf16.msra.mxu0 0
        %1819 = vmatprep.subr.bf16.mxu0 0
        %1820 = vmatpush1.bf16.msra.mxu0 0
        %1821 = vmatprep.subr.bf16.mxu0 0
        %1822 = vmatpush1.bf16.msra.mxu0 0
        %1823 = vmatprep.subr.bf16.mxu0 0
        %1824 = vmatpush1.bf16.msra.mxu0 0
        %1825 = vmatprep.subr.bf16.mxu0 0
        %1826 = vmatpush1.bf16.msra.mxu0 0
        %1827 = vmatprep.subr.bf16.mxu0 0
        %1828 = vmatpush1.bf16.msra.mxu0 0
        %1829 = vmatprep.mubr.bf16.mxu0 0
        %1830 = vmatmul.mubr.bf16.gmra.mrb[0].mxu0 %v1795
        %v1831 = vpop.f32.mrb[0].mxu0
        %v1832 = vadd.f32 %v1793, %v1831
        %v1833 = vpop.f32.mrb[0].mxu0
        %v1834 = vpop.f32.mrb[0].mxu0
        %v1835 = vpop.f32.mrb[0].mxu0
        %1836 = vdwg.mxu0
        %1837 = vst [vmem:[%s576] sm:$0x1] %v1832
        %s1838 = sand.u32 %s428, 1
        %s1839 = scalar_lea.sflag [#allocation3], %s1838
        %s1840 = sand.u32 %s428, 1
        %s1841 = scalar_lea.vmem [#allocation2], %s1840
        // Predicated region
        $region93: #{forward.1} parent=91 // pred_check
          %p1842 = pneg %p438
        $region94: #{forward.1} parent=91 // pred_check_branch
          %1844 = sbr.rel (%p1842) target = $region96
        $region95: #{forward.1} parent=91 // pred_region
          %s1846 = ssub.s32 16, 16
          %1847 = vsyncadd %s1839, %s1846
          %s1848 = smul.addr %s32, 16
          %s1849 = scalar_lea.hbm %s18, %s1848
          %s1851 = sshll.u32 %s1841, 4
          %s1852 = int_to_ptr.vmem [resolvable:$true] %s1851
          %1854 = dma.vmem_to_hbm [thread:$0]  %s1852, 16, %s1849, %s1839
        $region96: #{forward.1} parent=91 // pred_fallthru
          _
      $region92: #{forward.1} parent=5 // pred_fallthru
        _
      %p1855 = scmp.le.s32.totalorder 2, %s27
      // Predicated region
      $region97: #{forward.1} parent=5 // pred_check
        %p1856 = pneg %p1855
      $region98: #{forward.1} parent=5 // pred_check_branch
        %1858 = sbr.rel (%p1856) target = $region100
      $region99: #{forward.1} parent=5 // pred_region
        %s1859 = ssub.s32 %s27, 2
        // Predicated region
        $region101: #{forward.1} parent=99 // pred_check
          %p1860 = pneg %p444
        $region102: #{forward.1} parent=99 // pred_check_branch
          %1862 = sbr.rel (%p1860) target = $region104
        $region103: #{forward.1} parent=99 // pred_region
          %s1863 = sand.u32 %s429, 1
          %s1864 = scalar_lea.sflag [#allocation3], %s1863
          %s1865 = sand.u32 %s429, 1
          %s1866 = scalar_lea.vmem [#allocation2], %s1865
          %1867 = dma.done %s1864, 16
        $region104: #{forward.1} parent=99 // pred_fallthru
          _
      $region100: #{forward.1} parent=5 // pred_fallthru
        _
    $region6: #{forward.1} parent=1 // loop_footer
      %s31 = sadd.s32 1, %s27
    $region7: #{forward.1} parent=1 // loop_footer_branch
      %26 = sbr.rel target = $region3
    $region8: #{forward.1} parent=1 // loop_exit
      _
    %1868 = vsyncpa [#allocation3], 1
    %s1869 = scalar_lea.sflag [#allocation3], 1
    %1870 = vsyncpa %s1869, 1

</llo_original>
